<compile_context>
chip_gen: v7x
topology: tpu7x:2x2x1
jax: 0.10.0
libtpu: 0.0.40
codegen_flags: <defaults>
</compile_context>

<pallas_src>
import functools

import jax
import jax.numpy as jnp
from jax.experimental import pallas as pl
from jax.experimental.pallas import tpu as pltpu


def _cross_attn_kernel(q_ref, kv_ref, qape_ref, kapep_ref, pos_ref,
                       wq_ref, wkv_ref, wp_ref, bp_ref, o_ref,
                       kh_ref, vh_ref, *, num_heads, head_dim):
    """Grid = (batch, q_tile); q_tile innermost.  k/v projected once per batch
    element (qi == 0) into bf16 scratch and reused by every q tile."""
    qi = pl.program_id(1)
    tq, dim = q_ref.shape                        # (TQ, C)
    l_kv = kv_ref.shape[0]                       # (L_kv, C)

    @pl.when(qi == 0)
    def _():
        # Fused k/v projection: one (L_kv, C) @ (C, 2C) MXU matmul.
        kv_in = kv_ref[...].astype(jnp.bfloat16)
        kv_proj = jnp.dot(kv_in, wkv_ref[...],
                          preferred_element_type=jnp.float32)    # (L_kv, 2C)
        # k gets the precomputed (k_ape @ wk) correction; v uses raw kv.
        k_bf = (kv_proj[:, :dim] + kapep_ref[...]).astype(jnp.bfloat16)
        v_bf = kv_proj[:, dim:].astype(jnp.bfloat16)
        # bf16 BEFORE the head-split relayout.
        kh_ref[...] = jnp.transpose(
            k_bf.reshape(l_kv, num_heads, head_dim), (1, 0, 2))  # (H, L_kv, hd)
        vh_ref[...] = jnp.transpose(
            v_bf.reshape(l_kv, num_heads, head_dim), (1, 0, 2))

    # q projection; softmax scale is pre-folded into wq.  APE added in f32.
    q_in = (q_ref[...] + qape_ref[...].astype(jnp.float32)).astype(jnp.bfloat16)
    q_proj = jnp.dot(q_in, wq_ref[...], preferred_element_type=jnp.float32)
    qh = jnp.transpose(
        q_proj.astype(jnp.bfloat16).reshape(tq, num_heads, head_dim), (1, 0, 2))

    # Head-batched scores (contraction on last dims, no explicit k.T).
    s = jnp.einsum("hqd,hkd->hqk", qh, kh_ref[...],
                   preferred_element_type=jnp.float32)           # (H, TQ, L_kv)
    s = s + pos_ref[...].astype(jnp.float32)

    # Numerically stable softmax over L_kv in f32 (exact divide).
    s = s - jnp.max(s, axis=-1, keepdims=True)
    p = jnp.exp(s)
    p = p / jnp.sum(p, axis=-1, keepdims=True)

    # x = attn @ v, head-batched; merge heads back to (TQ, C) in bf16.
    x = jnp.einsum("hqk,hkd->hqd", p.astype(jnp.bfloat16), vh_ref[...],
                   preferred_element_type=jnp.float32)           # (H, TQ, hd)
    x = jnp.transpose(x.astype(jnp.bfloat16), (1, 0, 2)).reshape(tq, dim)

    # Output projection (K=C) + bias.
    out = jnp.dot(x, wp_ref[...], preferred_element_type=jnp.float32) + bp_ref[...]
    o_ref[...] = out.astype(o_ref.dtype)


def _vmem_capacity_bytes():
    try:
        return int(pltpu.get_tpu_info().vmem_capacity_bytes)
    except Exception:
        return 64 * 1024 * 1024      # conservative fallback (v7x per-core VMEM)


def _estimate_vmem_bytes(tq, l_kv, c, h):
    """Rough per-step VMEM footprint: double-buffered blocks + scratch + temps."""
    dbl = 2
    blocks = (dbl * tq * c * 4 +           # q (f32)
              dbl * l_kv * c * 4 +         # kv (f32)
              dbl * tq * c * 2 +           # q_ape (bf16)
              dbl * l_kv * c * 4 +         # k_ape @ wk correction (f32)
              dbl * h * tq * l_kv * 2 +    # attn_pos (bf16)
              dbl * tq * c * 4 +           # output (f32)
              dbl * 8 * c * c +            # wq + wkv + wp (bf16)
              dbl * c * 4)                 # proj bias (f32)
    scratch = 2 * l_kv * c * 2             # k/v head-split scratch (bf16)
    temps = 3 * h * tq * l_kv * 4 + 8 * tq * c * 4 + 4 * l_kv * c * 4
    return blocks + scratch + temps


def _pick_q_tile(l_q, l_kv, c, h, vmem_budget):
    """Return (TQ, padded_L_q); TQ divides padded_L_q."""
    if l_q <= 512 and _estimate_vmem_bytes(l_q, l_kv, c, h) <= vmem_budget:
        return l_q, l_q                                   # single full tile
    for t in (512, 256, 128):
        if _estimate_vmem_bytes(t, l_kv, c, h) <= vmem_budget:
            return t, pl.cdiv(l_q, t) * t
    t = 8                                                 # minimal sublane tile
    return t, pl.cdiv(l_q, t) * t


def prepare_params(params, *, num_heads):
    """One-time parameter prep (do this at load time, not per forward call):
    fold softmax scale into wq, fuse wk|wv, cast weights to bf16."""
    c = params["wq"].shape[0]
    head_dim = c // num_heads
    scale = head_dim ** (-0.5)
    return {
        "wq": (params["wq"].astype(jnp.float32) * scale).astype(jnp.bfloat16),
        "wkv": jnp.concatenate([params["wk"], params["wv"]],
                               axis=1).astype(jnp.bfloat16),      # (C, 2C)
        "wk_f32": params["wk"].astype(jnp.float32),  # for the k_ape correction
        "wp": params["wp"].astype(jnp.bfloat16),
        "bp": params["bp"].reshape(1, c).astype(jnp.float32),
    }


def cross_attention(q, kv, q_ape, k_ape, attn_pos, prepared, *, num_heads):
    """Pallas CrossAttention.forward (default branch).

    q:        (B, L_q, C)
    kv:       (B, L_kv, C)
    q_ape:    (1 or B, L_q, C)
    k_ape:    (1 or B, L_kv, C)
    attn_pos: (1 or B, num_heads, L_q, L_kv)
    prepared: output of prepare_params
    returns:  (B, L_q, C)
    """
    B, L_q, C = q.shape
    L_kv = kv.shape[1]
    head_dim = C // num_heads

    cap = _vmem_capacity_bytes()
    TQ, L_q_pad = _pick_q_tile(L_q, L_kv, C, num_heads, int(cap * 0.5))
    n_q = L_q_pad // TQ

    # Precompute the (k_ape @ wk) correction once; it is small and stays
    # VMEM-resident across the q-tile loop (batch dim kept at 1 if broadcast).
    kape_proj = jnp.einsum("blc,cd->bld", k_ape.astype(jnp.float32),
                           prepared["wk_f32"])            # (1 or B, L_kv, C) f32

    # Halve the dominant DMA streams (attn_pos is the largest per-step block).
    q_ape_b = q_ape.astype(jnp.bfloat16)
    attn_pos_b = attn_pos.astype(jnp.bfloat16)

    # Pad L_q to a tile multiple; tail rows are sliced off at the end.
    if L_q_pad != L_q:
        pad = L_q_pad - L_q
        q = jnp.pad(q, ((0, 0), (0, pad), (0, 0)))
        q_ape_b = jnp.pad(q_ape_b, ((0, 0), (0, pad), (0, 0)))
        attn_pos_b = jnp.pad(attn_pos_b, ((0, 0), (0, 0), (0, pad), (0, 0)))

    # Batch-broadcast tensors keep their size-1 leading dim (no HBM duplication).
    if q_ape_b.shape[0] == 1:
        qape_spec = pl.BlockSpec((None, TQ, C), lambda b, qi: (0, qi, 0))
    else:
        qape_spec = pl.BlockSpec((None, TQ, C), lambda b, qi: (b, qi, 0))
    if kape_proj.shape[0] == 1:
        kapep_spec = pl.BlockSpec((None, L_kv, C), lambda b, qi: (0, 0, 0))
    else:
        kapep_spec = pl.BlockSpec((None, L_kv, C), lambda b, qi: (b, 0, 0))
    if attn_pos_b.shape[0] == 1:
        pos_spec = pl.BlockSpec((None, num_heads, TQ, L_kv),
                                lambda b, qi: (0, 0, qi, 0))
    else:
        pos_spec = pl.BlockSpec((None, num_heads, TQ, L_kv),
                                lambda b, qi: (b, 0, qi, 0))

    kernel = functools.partial(_cross_attn_kernel, num_heads=num_heads,
                               head_dim=head_dim)

    out = pl.pallas_call(
        kernel,
        out_shape=jax.ShapeDtypeStruct((B, L_q_pad, C), q.dtype),
        grid_spec=pltpu.PrefetchScalarGridSpec(
            num_scalar_prefetch=0,
            # Batch outer (megacore-parallel), q tiles innermost: kv block and
            # the k/v projection scratch stay resident across all q tiles.
            grid=(B, n_q),
            in_specs=[
                pl.BlockSpec((None, TQ, C), lambda b, qi: (b, qi, 0)),     # q
                pl.BlockSpec((None, L_kv, C), lambda b, qi: (b, 0, 0)),    # kv
                qape_spec,                                                 # q_ape
                kapep_spec,                                                # k_ape @ wk
                pos_spec,                                                  # attn_pos
                pl.BlockSpec((C, C), lambda b, qi: (0, 0)),                # wq * scale
                pl.BlockSpec((C, 2 * C), lambda b, qi: (0, 0)),            # wk | wv
                pl.BlockSpec((C, C), lambda b, qi: (0, 0)),                # wproj
                pl.BlockSpec((1, C), lambda b, qi: (0, 0)),                # bproj
            ],
            out_specs=pl.BlockSpec((None, TQ, C), lambda b, qi: (b, qi, 0)),
            scratch_shapes=[
                pltpu.VMEM((num_heads, L_kv, head_dim), jnp.bfloat16),     # k heads
                pltpu.VMEM((num_heads, L_kv, head_dim), jnp.bfloat16),     # v heads
            ],
        ),
        compiler_params=pltpu.CompilerParams(
            # q-tile axis carries the k/v scratch across steps -> sequential.
            dimension_semantics=("parallel", "arbitrary"),
            vmem_limit_bytes=int(cap * 0.75),
        ),
    )(q, kv, q_ape_b, kape_proj, attn_pos_b,
      prepared["wq"], prepared["wkv"], prepared["wp"], prepared["bp"])

    if L_q_pad != L_q:
        out = out[:, :L_q, :]
    return out


def cross_attention_ref(q, kv, q_ape, k_ape, attn_pos, params, *, num_heads):
    """Pure-JAX f32 reference mirroring the PyTorch forward (for validation)."""
    B, L_q, C = q.shape
    L_kv = kv.shape[1]
    hd = C // num_heads
    scale = hd ** (-0.5)
    qi = q + q_ape
    ki = kv + k_ape
    qp = (qi @ params["wq"]).reshape(B, L_q, num_heads, hd).transpose(0, 2, 1, 3)
    kp = (ki @ params["wk"]).reshape(B, L_kv, num_heads, hd).transpose(0, 2, 1, 3)
    vp = (kv @ params["wv"]).reshape(B, L_kv, num_heads, hd).transpose(0, 2, 1, 3)
    attn = jnp.einsum("bhqd,bhkd->bhqk", qp, kp) * scale + attn_pos
    attn = jax.nn.softmax(attn, axis=-1)
    x = jnp.einsum("bhqk,bhkd->bhqd", attn, vp)
    x = x.transpose(0, 2, 1, 3).reshape(B, L_q, C)
    return x @ params["wp"] + params["bp"]


if __name__ == "__main__":
    B, C, H = 2, 32, 4
    L_q, L_kv = 16, 8

    key = jax.random.PRNGKey(0)
    ks = jax.random.split(key, 10)
    q = jax.random.normal(ks[0], (B, L_q, C), jnp.float32)
    kv = jax.random.normal(ks[1], (B, L_kv, C), jnp.float32)
    q_ape = jax.random.normal(ks[2], (1, L_q, C), jnp.float32)
    k_ape = jax.random.normal(ks[3], (1, L_kv, C), jnp.float32)
    attn_pos = jax.random.normal(ks[4], (1, H, L_q, L_kv), jnp.float32)

    # Deterministic synthetic parameters (weights stored as (in, out)).
    w_scale = 1.0 / jnp.sqrt(jnp.float32(C))
    params = {
        "wq": jax.random.normal(ks[5], (C, C), jnp.float32) * w_scale,
        "wk": jax.random.normal(ks[6], (C, C), jnp.float32) * w_scale,
        "wv": jax.random.normal(ks[7], (C, C), jnp.float32) * w_scale,
        "wp": jax.random.normal(ks[8], (C, C), jnp.float32) * w_scale,
        "bp": jax.random.normal(ks[9], (C,), jnp.float32) * 0.1,
    }

    prepared = prepare_params(params, num_heads=H)
    out = cross_attention(q, kv, q_ape, k_ape, attn_pos, prepared, num_heads=H)
    out = jax.block_until_ready(out)

    ref = cross_attention_ref(q, kv, q_ape, k_ape, attn_pos, params, num_heads=H)
    assert out.shape == (B, L_q, C)
    # Kernel uses bf16 MXU inputs (weights, activations, attn_pos) vs a
    # pure-f32 reference, so tolerances are bf16-level.
    assert jnp.allclose(out, ref, atol=1e-1, rtol=1e-1), "mismatch vs reference"

    print("KERNEL_OK")
</pallas_src>

<mosaic_0001>
module attributes {stable_mosaic.version = 11 : i64} {
  func.func @_cross_attn_kernel(%arg0: i32, %arg1: i32, %arg2: memref<1x16x32xf32, #tpu.memory_space<vmem>>, %arg3: memref<1x8x32xf32, #tpu.memory_space<vmem>>, %arg4: memref<1x16x32xbf16, #tpu.memory_space<vmem>>, %arg5: memref<1x8x32xf32, #tpu.memory_space<vmem>>, %arg6: memref<1x4x16x8xbf16, #tpu.memory_space<vmem>>, %arg7: memref<32x32xbf16, #tpu.memory_space<vmem>>, %arg8: memref<32x64xbf16, #tpu.memory_space<vmem>>, %arg9: memref<32x32xbf16, #tpu.memory_space<vmem>>, %arg10: memref<1x32xf32, #tpu.memory_space<vmem>>, %arg11: memref<1x16x32xf32, #tpu.memory_space<vmem>>, %arg12: memref<4x8x8xbf16, #tpu.memory_space<vmem>>, %arg13: memref<4x8x8xbf16, #tpu.memory_space<vmem>>) attributes {dimension_semantics = [#tpu.dimension_semantics<parallel>, #tpu.dimension_semantics<arbitrary>], iteration_bounds = array<i64: 2, 1>, scalar_prefetch = 0 : i64, scratch_operands = 2 : i64, tpu.core_type = #tpu.core_type<tc>, window_params = [{transform_indices = @transform_0, window_bounds = array<i64: 1, 16, 32>}, {transform_indices = @transform_1, window_bounds = array<i64: 1, 8, 32>}, {transform_indices = @transform_2, window_bounds = array<i64: 1, 16, 32>}, {pipeline_mode = #tpu.pipeline_mode<synchronous>, transform_indices = @transform_3, window_bounds = array<i64: 1, 8, 32>}, {transform_indices = @transform_4, window_bounds = array<i64: 1, 4, 16, 8>}, {pipeline_mode = #tpu.pipeline_mode<synchronous>, transform_indices = @transform_5, window_bounds = array<i64: 32, 32>}, {pipeline_mode = #tpu.pipeline_mode<synchronous>, transform_indices = @transform_6, window_bounds = array<i64: 32, 64>}, {pipeline_mode = #tpu.pipeline_mode<synchronous>, transform_indices = @transform_7, window_bounds = array<i64: 32, 32>}, {pipeline_mode = #tpu.pipeline_mode<synchronous>, transform_indices = @transform_8, window_bounds = array<i64: 1, 32>}, {transform_indices = @transform_9, window_bounds = array<i64: 1, 16, 32>}]} {
    %c0_i32 = arith.constant 0 : i32
    %0 = arith.cmpi eq, %arg1, %c0_i32 : i32
    %1 = arith.extui %0 : i1 to i32
    %c0_i32_0 = arith.constant 0 : i32
    %2 = arith.cmpi ne, %1, %c0_i32_0 : i32
    scf.if %2 {
      %c0_30 = arith.constant 0 : index
      %c0_31 = arith.constant 0 : index
      %c0_32 = arith.constant 0 : index
      %44 = vector.load %arg3[%c0_30, %c0_31, %c0_32] : memref<1x8x32xf32, #tpu.memory_space<vmem>>, vector<1x8x32xf32>
      %45 = vector.shape_cast %44 : vector<1x8x32xf32> to vector<8x32xf32>
      %46 = arith.truncf %45 : vector<8x32xf32> to vector<8x32xbf16>
      %c0_33 = arith.constant 0 : index
      %c0_34 = arith.constant 0 : index
      %47 = vector.load %arg8[%c0_33, %c0_34] : memref<32x64xbf16, #tpu.memory_space<vmem>>, vector<32x64xbf16>
      %cst_35 = arith.constant dense<0.000000e+00> : vector<8x64xf32>
      %48 = tpu.matmul %46, %47, %cst_35 {dimension_numbers = #tpu.dot_dimension_numbers<[1], [0], [0], [1], [0, 0, 1, 1], [], []>} : vector<8x32xbf16>, vector<32x64xbf16>, vector<8x64xf32> -> vector<8x64xf32>
      %49 = vector.extract_strided_slice %48 {offsets = [0, 0], sizes = [8, 32], strides = [1, 1]} : vector<8x64xf32> to vector<8x32xf32>
      %c0_36 = arith.constant 0 : index
      %c0_37 = arith.constant 0 : index
      %c0_38 = arith.constant 0 : index
      %50 = vector.load %arg5[%c0_36, %c0_37, %c0_38] : memref<1x8x32xf32, #tpu.memory_space<vmem>>, vector<1x8x32xf32>
      %51 = vector.shape_cast %50 : vector<1x8x32xf32> to vector<8x32xf32>
      %52 = arith.addf %49, %51 : vector<8x32xf32>
      %53 = arith.truncf %52 : vector<8x32xf32> to vector<8x32xbf16>
      %54 = vector.extract_strided_slice %48 {offsets = [0, 32], sizes = [8, 32], strides = [1, 1]} : vector<8x64xf32> to vector<8x32xf32>
      %55 = arith.truncf %54 : vector<8x32xf32> to vector<8x32xbf16>
      %56 = vector.shape_cast %53 : vector<8x32xbf16> to vector<8x4x8xbf16>
      %57 = tpu.transpose %56, [1, 0, 2] : vector<8x4x8xbf16> -> vector<4x8x8xbf16>
      %c0_39 = arith.constant 0 : index
      %c0_40 = arith.constant 0 : index
      %c0_41 = arith.constant 0 : index
      %58 = vector.load %arg12[%c0_39, %c0_40, %c0_41] : memref<4x8x8xbf16, #tpu.memory_space<vmem>>, vector<4x8x8xbf16>
      tpu.vector_store %arg12[%c0_39, %c0_40, %c0_41], %57 {strides = array<i32>} : memref<4x8x8xbf16, #tpu.memory_space<vmem>>, vector<4x8x8xbf16>,
      %59 = vector.shape_cast %55 : vector<8x32xbf16> to vector<8x4x8xbf16>
      %60 = tpu.transpose %59, [1, 0, 2] : vector<8x4x8xbf16> -> vector<4x8x8xbf16>
      %c0_42 = arith.constant 0 : index
      %c0_43 = arith.constant 0 : index
      %c0_44 = arith.constant 0 : index
      %61 = vector.load %arg13[%c0_42, %c0_43, %c0_44] : memref<4x8x8xbf16, #tpu.memory_space<vmem>>, vector<4x8x8xbf16>
      tpu.vector_store %arg13[%c0_42, %c0_43, %c0_44], %60 {strides = array<i32>} : memref<4x8x8xbf16, #tpu.memory_space<vmem>>, vector<4x8x8xbf16>,
    } else {
    }
    %c0 = arith.constant 0 : index
    %c0_1 = arith.constant 0 : index
    %c0_2 = arith.constant 0 : index
    %3 = vector.load %arg2[%c0, %c0_1, %c0_2] : memref<1x16x32xf32, #tpu.memory_space<vmem>>, vector<1x16x32xf32>
    %4 = vector.shape_cast %3 : vector<1x16x32xf32> to vector<16x32xf32>
    %c0_3 = arith.constant 0 : index
    %c0_4 = arith.constant 0 : index
    %c0_5 = arith.constant 0 : index
    %5 = vector.load %arg4[%c0_3, %c0_4, %c0_5] : memref<1x16x32xbf16, #tpu.memory_space<vmem>>, vector<1x16x32xbf16>
    %6 = vector.shape_cast %5 : vector<1x16x32xbf16> to vector<16x32xbf16>
    %7 = arith.extf %6 : vector<16x32xbf16> to vector<16x32xf32>
    %8 = arith.addf %4, %7 : vector<16x32xf32>
    %9 = arith.truncf %8 : vector<16x32xf32> to vector<16x32xbf16>
    %c0_6 = arith.constant 0 : index
    %c0_7 = arith.constant 0 : index
    %10 = vector.load %arg7[%c0_6, %c0_7] : memref<32x32xbf16, #tpu.memory_space<vmem>>, vector<32x32xbf16>
    %cst = arith.constant dense<0.000000e+00> : vector<16x32xf32>
    %11 = tpu.matmul %9, %10, %cst {dimension_numbers = #tpu.dot_dimension_numbers<[1], [0], [0], [1], [0, 0, 1, 1], [], []>} : vector<16x32xbf16>, vector<32x32xbf16>, vector<16x32xf32> -> vector<16x32xf32>
    %12 = arith.truncf %11 : vector<16x32xf32> to vector<16x32xbf16>
    %13 = vector.shape_cast %12 : vector<16x32xbf16> to vector<16x4x8xbf16>
    %14 = tpu.transpose %13, [1, 0, 2] : vector<16x4x8xbf16> -> vector<4x16x8xbf16>
    %c0_8 = arith.constant 0 : index
    %c0_9 = arith.constant 0 : index
    %c0_10 = arith.constant 0 : index
    %15 = vector.load %arg12[%c0_8, %c0_9, %c0_10] : memref<4x8x8xbf16, #tpu.memory_space<vmem>>, vector<4x8x8xbf16>
    "tpu.trace_start"() <{level = 10 : i32, message = "hqd,hkd->hqk"}> : () -> ()
    %cst_11 = arith.constant dense<0.000000e+00> : vector<4x16x8xf32>
    %16 = tpu.matmul %14, %15, %cst_11 {dimension_numbers = #tpu.dot_dimension_numbers<[2], [2], [1], [1], [0, 0, 0, 1, 1, 1], [0], [0]>} : vector<4x16x8xbf16>, vector<4x8x8xbf16>, vector<4x16x8xf32> -> vector<4x16x8xf32>
    "tpu.trace_stop"() : () -> ()
    %c0_12 = arith.constant 0 : index
    %c0_13 = arith.constant 0 : index
    %c0_14 = arith.constant 0 : index
    %c0_15 = arith.constant 0 : index
    %17 = vector.load %arg6[%c0_12, %c0_13, %c0_14, %c0_15] : memref<1x4x16x8xbf16, #tpu.memory_space<vmem>>, vector<1x4x16x8xbf16>
    %18 = vector.shape_cast %17 : vector<1x4x16x8xbf16> to vector<4x16x8xbf16>
    %19 = arith.extf %18 : vector<4x16x8xbf16> to vector<4x16x8xf32>
    %20 = arith.addf %16, %19 : vector<4x16x8xf32>
    %cst_16 = arith.constant dense<0xFF800000> : vector<4x16xf32>
    %21 = vector.multi_reduction <maximumf>, %20, %cst_16 [2] : vector<4x16x8xf32> to vector<4x16xf32>
    %22 = vector.shape_cast %21 : vector<4x16xf32> to vector<4x16x1xf32>
    %23 = vector.broadcast %22 : vector<4x16x1xf32> to vector<4x16x8xf32>
    %24 = arith.subf %20, %23 : vector<4x16x8xf32>
    %25 = math.exp %24 : vector<4x16x8xf32>
    %cst_17 = arith.constant dense<0.000000e+00> : vector<4x16xf32>
    %26 = vector.multi_reduction <add>, %25, %cst_17 [2] : vector<4x16x8xf32> to vector<4x16xf32>
    %27 = vector.shape_cast %26 : vector<4x16xf32> to vector<4x16x1xf32>
    %28 = vector.broadcast %27 : vector<4x16x1xf32> to vector<4x16x8xf32>
    %29 = arith.divf %25, %28 : vector<4x16x8xf32>
    %30 = arith.truncf %29 : vector<4x16x8xf32> to vector<4x16x8xbf16>
    %c0_18 = arith.constant 0 : index
    %c0_19 = arith.constant 0 : index
    %c0_20 = arith.constant 0 : index
    %31 = vector.load %arg13[%c0_18, %c0_19, %c0_20] : memref<4x8x8xbf16, #tpu.memory_space<vmem>>, vector<4x8x8xbf16>
    "tpu.trace_start"() <{level = 10 : i32, message = "hqk,hkd->hqd"}> : () -> ()
    %cst_21 = arith.constant dense<0.000000e+00> : vector<4x16x8xf32>
    %32 = tpu.matmul %30, %31, %cst_21 {dimension_numbers = #tpu.dot_dimension_numbers<[2], [1], [1], [2], [0, 0, 0, 1, 1, 2], [0], [0]>} : vector<4x16x8xbf16>, vector<4x8x8xbf16>, vector<4x16x8xf32> -> vector<4x16x8xf32>
    "tpu.trace_stop"() : () -> ()
    %33 = arith.truncf %32 : vector<4x16x8xf32> to vector<4x16x8xbf16>
    %34 = tpu.transpose %33, [1, 0, 2] : vector<4x16x8xbf16> -> vector<16x4x8xbf16>
    %35 = vector.shape_cast %34 : vector<16x4x8xbf16> to vector<16x32xbf16>
    %c0_22 = arith.constant 0 : index
    %c0_23 = arith.constant 0 : index
    %36 = vector.load %arg9[%c0_22, %c0_23] : memref<32x32xbf16, #tpu.memory_space<vmem>>, vector<32x32xbf16>
    %cst_24 = arith.constant dense<0.000000e+00> : vector<16x32xf32>
    %37 = tpu.matmul %35, %36, %cst_24 {dimension_numbers = #tpu.dot_dimension_numbers<[1], [0], [0], [1], [0, 0, 1, 1], [], []>} : vector<16x32xbf16>, vector<32x32xbf16>, vector<16x32xf32> -> vector<16x32xf32>
    %c0_25 = arith.constant 0 : index
    %c0_26 = arith.constant 0 : index
    %38 = vector.load %arg10[%c0_25, %c0_26] : memref<1x32xf32, #tpu.memory_space<vmem>>, vector<1x32xf32>
    %39 = vector.broadcast %38 : vector<1x32xf32> to vector<16x32xf32>
    %40 = arith.addf %37, %39 : vector<16x32xf32>
    %c0_27 = arith.constant 0 : index
    %c0_28 = arith.constant 0 : index
    %c0_29 = arith.constant 0 : index
    %41 = vector.load %arg11[%c0_27, %c0_28, %c0_29] : memref<1x16x32xf32, #tpu.memory_space<vmem>>, vector<1x16x32xf32>
    %42 = vector.shape_cast %41 : vector<1x16x32xf32> to vector<16x32xf32>
    %43 = vector.shape_cast %40 : vector<16x32xf32> to vector<1x16x32xf32>
    tpu.vector_store %arg11[%c0_27, %c0_28, %c0_29], %43 {strides = array<i32>} : memref<1x16x32xf32, #tpu.memory_space<vmem>>, vector<1x16x32xf32>,
    return
  }
  func.func @transform_0(%arg0: i32, %arg1: i32) -> (i32, i32, i32) {
    %c0_i32 = arith.constant 0 : i32
    %c0_i32_0 = arith.constant 0 : i32
    return %arg0, %arg1, %c0_i32 : i32, i32, i32
  }
  func.func @transform_1(%arg0: i32, %arg1: i32) -> (i32, i32, i32) {
    %c0_i32 = arith.constant 0 : i32
    %c0_i32_0 = arith.constant 0 : i32
    %c0_i32_1 = arith.constant 0 : i32
    return %arg0, %c0_i32, %c0_i32_0 : i32, i32, i32
  }
  func.func @transform_2(%arg0: i32, %arg1: i32) -> (i32, i32, i32) {
    %c0_i32 = arith.constant 0 : i32
    %c0_i32_0 = arith.constant 0 : i32
    %c0_i32_1 = arith.constant 0 : i32
    return %c0_i32, %arg1, %c0_i32_0 : i32, i32, i32
  }
  func.func @transform_3(%arg0: i32, %arg1: i32) -> (i32, i32, i32) {
    %c0_i32 = arith.constant 0 : i32
    %c0_i32_0 = arith.constant 0 : i32
    %c0_i32_1 = arith.constant 0 : i32
    %c0_i32_2 = arith.constant 0 : i32
    return %c0_i32, %c0_i32_0, %c0_i32_1 : i32, i32, i32
  }
  func.func @transform_4(%arg0: i32, %arg1: i32) -> (i32, i32, i32, i32) {
    %c0_i32 = arith.constant 0 : i32
    %c0_i32_0 = arith.constant 0 : i32
    %c0_i32_1 = arith.constant 0 : i32
    %c0_i32_2 = arith.constant 0 : i32
    return %c0_i32, %c0_i32_0, %arg1, %c0_i32_1 : i32, i32, i32, i32
  }
  func.func @transform_5(%arg0: i32, %arg1: i32) -> (i32, i32) {
    %c0_i32 = arith.constant 0 : i32
    %c0_i32_0 = arith.constant 0 : i32
    %c0_i32_1 = arith.constant 0 : i32
    return %c0_i32, %c0_i32_0 : i32, i32
  }
  func.func @transform_6(%arg0: i32, %arg1: i32) -> (i32, i32) {
    %c0_i32 = arith.constant 0 : i32
    %c0_i32_0 = arith.constant 0 : i32
    %c0_i32_1 = arith.constant 0 : i32
    return %c0_i32, %c0_i32_0 : i32, i32
  }
  func.func @transform_7(%arg0: i32, %arg1: i32) -> (i32, i32) {
    %c0_i32 = arith.constant 0 : i32
    %c0_i32_0 = arith.constant 0 : i32
    %c0_i32_1 = arith.constant 0 : i32
    return %c0_i32, %c0_i32_0 : i32, i32
  }
  func.func @transform_8(%arg0: i32, %arg1: i32) -> (i32, i32) {
    %c0_i32 = arith.constant 0 : i32
    %c0_i32_0 = arith.constant 0 : i32
    %c0_i32_1 = arith.constant 0 : i32
    return %c0_i32, %c0_i32_0 : i32, i32
  }
  func.func @transform_9(%arg0: i32, %arg1: i32) -> (i32, i32, i32) {
    %c0_i32 = arith.constant 0 : i32
    %c0_i32_0 = arith.constant 0 : i32
    return %arg0, %arg1, %c0_i32 : i32, i32, i32
  }
}

</mosaic_0001>

<llo_original>
// kernel: tpu_custom_call.1
$region0: #{tpu_custom_call.1}
  #allocation0 [shape = 'u32[]', space=smem, size = 0x4, offset = 0x4, fixed_abs, tag = 'smem constant byte address 0x4 - core index']
  #allocation1 [shape = 'u32[144,128]{1,0:T(1,128)}', space=vmem, size = 0x12000, scoped, tag = 'internal scratch']
  #allocation2 [shape = 'bf16[4,8,8]{2,1,0:T(8,128)(2,1)}', space=vmem, size = 0x2000, scoped, tag = 'scratch operand']
  #allocation3 [shape = 'bf16[4,8,8]{2,1,0:T(8,128)(2,1)}', space=vmem, size = 0x2000, scoped, tag = 'scratch operand']
  %s0 = inlined_call_operand.vmem [shape: f32[2,16,32], index: 0, kind: input, shape index: {}]
  %s1 = inlined_call_operand.vmem [shape: f32[2,8,32], index: 1, kind: input, shape index: {}]
  %s2 = inlined_call_operand.hbm [shape: bf16[1,16,32], index: 2, kind: input, shape index: {}]
  %s3 = inlined_call_operand.hbm [shape: f32[1,8,32], index: 3, kind: input, shape index: {}]
  %s4 = inlined_call_operand.vmem [shape: bf16[1,4,16,8], index: 4, kind: input, shape index: {}]
  %s5 = inlined_call_operand.vmem [shape: bf16[32,32], index: 5, kind: input, shape index: {}]
  %s6 = inlined_call_operand.hbm [shape: bf16[32,64], index: 6, kind: input, shape index: {}]
  %s7 = inlined_call_operand.hbm [shape: bf16[32,32], index: 7, kind: input, shape index: {}]
  %s8 = inlined_call_operand.vmem [shape: f32[1,32], index: 8, kind: input, shape index: {}]
  %s9 = inlined_call_operand.hbm [shape: f32[2,16,32], index: 9, kind: output, shape index: {}]
  %s10 = sld [smem:[#allocation0]]
  $region89: #{tpu_custom_call.1} parent=0
    _
  %s12 = ssub.s32 1, %s10
  %s13 = scalar_select 0, %s12, %s10
  $region1: #{tpu_custom_call.1} parent=0
    #allocation4 [shape = 'u8[4096]{0}', space=vmem, size = 0x1000, scoped, tag = 'input window, operand 2, single buffered']
    #allocation5 [shape = 's32[2]{0}', space=sflag, size = 0x8, scoped, tag = 'scoped memory for tpu_custom_call.1']
    #allocation6 [shape = 's32[2]{0}', space=sflag, size = 0x8, scoped, tag = 'scoped memory for tpu_custom_call.1']
    #allocation7 [shape = 'u8[4096]{0}', space=vmem, size = 0x1000, scoped, tag = 'input window, operand 3, single buffered']
    #allocation8 [shape = 's32[1]{0}', space=sflag, size = 0x4, scoped, tag = 'scoped memory for tpu_custom_call.1']
    #allocation9 [shape = 'u8[8192]{0}', space=vmem, size = 0x2000, scoped, tag = 'input window, operand 6, single buffered']
    #allocation10 [shape = 'u8[8192]{0}', space=vmem, size = 0x2000, scoped, tag = 'input window, operand 7, single buffered']
    #allocation11 [shape = 's32[1]{0}', space=sflag, size = 0x4, scoped, tag = 'scoped memory for tpu_custom_call.1']
    #allocation12 [shape = 'u8[16384]{0}', space=vmem, size = 0x4000, scoped, tag = 'output window, operand 0']
    %14 = vsyncpa [#allocation5], 0
    %15 = vsyncpa [#allocation8], 0
    %16 = vsyncpa [#allocation11], 0
    %17 = vsyncpa [#allocation6], 0
    %s18 = scalar_lea.sflag [#allocation6], 1
    %19 = vsyncpa %s18, 0
    loop: start=0, step=1, limit=4
    $region2: #{tpu_custom_call.1} parent=1 // loop_pre_header
      _
    $region3: #{tpu_custom_call.1} parent=1 // loop_header
      %s21 = sphi 0, %s25
      %p22 = scmp.ge.s32.totalorder %s21, 4
      %s28 = sphi 0, %s40
      %s29 = sphi 0, %s36
      %s30 = sphi 0, %s28
      %s31 = sphi 0, %s29
      %s32 = sphi 0, %s30
      %s33 = sphi 0, %s31
      %s45 = sphi 0, %s47
      %s48 = sphi 0, %s45
      %s49 = sphi 0, %s48
      %s65 = sphi 0, %s49
      %s71 = sphi 0, %s73
      %s74 = sphi 0, %s71
      %s75 = sphi 0, %s74
      %s91 = sphi 0, %s75
      %s97 = sphi 0, %s99
      %s100 = sphi 0, %s97
      %s101 = sphi 0, %s100
      %s117 = sphi 0, %s101
      %s121 = sphi 0, %s121
      %s123 = sphi 0, %s121
      %s124 = sphi 0, %s123
      %s138 = sphi 0, %s124
      %s144 = sphi 0, %s146
      %s147 = sphi 0, %s144
      %s148 = sphi 0, %s147
      %s164 = sphi 0, %s148
      %s168 = sphi 0, %s168
      %s170 = sphi 0, %s168
      %s171 = sphi 0, %s170
      %s185 = sphi 0, %s171
      %s189 = sphi 0, %s189
      %s191 = sphi 0, %s189
      %s192 = sphi 0, %s191
      %s206 = sphi 0, %s192
      %s210 = sphi 0, %s210
      %s212 = sphi 0, %s210
      %s213 = sphi 0, %s212
      %s227 = sphi 0, %s213
      %s231 = sphi 0, %s231
      %s233 = sphi 0, %s231
      %s234 = sphi 0, %s233
      %s248 = sphi 0, %s234
      %s256 = sphi 0, %s258
      %s259 = sphi 0, %s256
      %s260 = sphi 0, %s259
      %s276 = sphi 0, %s260
    $region4: #{tpu_custom_call.1} parent=1 // loop_header_branch
      %24 = sbr.rel (%p22) target = $region8
    $region5: #{tpu_custom_call.1} parent=1 // loop_body
      %s26 = ssub.s32 %s21, 1
      %s27 = ssub.s32 %s21, 2
      %s34 = sadd.s32 1, %s29
      %p35 = scmp.ge.s32.totalorder %s34, 1
      %s36 = scalar_select %p35, 0, %s34
      %s37 = sadd.s32 1, %s28
      %s38 = scalar_select %p35, %s37, %s28
      %p39 = scmp.ge.s32.totalorder %s38, 2
      %s40 = scalar_select %p39, 0, %s38
      %s41 = ssub.s32 %s28, %s40
      %s42 = ssub.s32 %s29, %s36
      %s43 = sor.u32 %s41, %s42
      %p44 = scmp.eq.s32.totalorder %s43, 0
      %s46 = sadd.s32 %s45, 1
      %s47 = scalar_select %p44, %s45, %s46
      %p50 = pneg %p44
      %p51 = scmp.eq.s32.totalorder %s21, 1
      %p52 = por %p50, %p51
      %p53 = scmp.ne.s32.totalorder %s45, %s48
      %p54 = scmp.eq.s32.totalorder %s21, 0
      %p55 = por %p53, %p54
      %p56 = scmp.ne.s32.totalorder %s45, %s48
      %p57 = scmp.eq.s32.totalorder %s26, 1
      %p58 = por %p56, %p57
      %p59 = scmp.ne.s32.totalorder %s48, %s49
      %p60 = scmp.eq.s32.totalorder %s26, 0
      %p61 = por %p59, %p60
      %p62 = scmp.ne.s32.totalorder %s48, %s49
      %p63 = scmp.eq.s32.totalorder %s27, 1
      %p64 = por %p62, %p63
      %p66 = scmp.ne.s32.totalorder %s49, %s65
      %p67 = scmp.eq.s32.totalorder %s27, 0
      %p68 = por %p66, %p67
      %s69 = ssub.s32 %s28, %s40
      %p70 = scmp.eq.s32.totalorder %s69, 0
      %s72 = sadd.s32 %s71, 1
      %s73 = scalar_select %p70, %s71, %s72
      %p76 = pneg %p70
      %p77 = scmp.eq.s32.totalorder %s21, 1
      %p78 = por %p76, %p77
      %p79 = scmp.ne.s32.totalorder %s71, %s74
      %p80 = scmp.eq.s32.totalorder %s21, 0
      %p81 = por %p79, %p80
      %p82 = scmp.ne.s32.totalorder %s71, %s74
      %p83 = scmp.eq.s32.totalorder %s26, 1
      %p84 = por %p82, %p83
      %p85 = scmp.ne.s32.totalorder %s74, %s75
      %p86 = scmp.eq.s32.totalorder %s26, 0
      %p87 = por %p85, %p86
      %p88 = scmp.ne.s32.totalorder %s74, %s75
      %p89 = scmp.eq.s32.totalorder %s27, 1
      %p90 = por %p88, %p89
      %p92 = scmp.ne.s32.totalorder %s75, %s91
      %p93 = scmp.eq.s32.totalorder %s27, 0
      %p94 = por %p92, %p93
      %s95 = ssub.s32 %s29, %s36
      %p96 = scmp.eq.s32.totalorder %s95, 0
      %s98 = sadd.s32 %s97, 1
      %s99 = scalar_select %p96, %s97, %s98
      %p102 = pneg %p96
      %p103 = scmp.eq.s32.totalorder %s21, 1
      %p104 = por %p102, %p103
      %p105 = scmp.ne.s32.totalorder %s97, %s100
      %p106 = scmp.eq.s32.totalorder %s21, 0
      %p107 = por %p105, %p106
      %p108 = scmp.ne.s32.totalorder %s97, %s100
      %p109 = scmp.eq.s32.totalorder %s26, 1
      %p110 = por %p108, %p109
      %p111 = scmp.ne.s32.totalorder %s100, %s101
      %p112 = scmp.eq.s32.totalorder %s26, 0
      %p113 = por %p111, %p112
      %p114 = scmp.ne.s32.totalorder %s100, %s101
      %p115 = scmp.eq.s32.totalorder %s27, 1
      %p116 = por %p114, %p115
      %p118 = scmp.ne.s32.totalorder %s101, %s117
      %p119 = scmp.eq.s32.totalorder %s27, 0
      %p120 = por %p118, %p119
      %s122 = sadd.s32 %s121, 1
      %p125 = scmp.eq.s32.totalorder %s21, 1
      %p126 = scmp.ne.s32.totalorder %s121, %s123
      %p127 = scmp.eq.s32.totalorder %s21, 0
      %p128 = por %p126, %p127
      %p129 = scmp.ne.s32.totalorder %s121, %s123
      %p130 = scmp.eq.s32.totalorder %s26, 1
      %p131 = por %p129, %p130
      %p132 = scmp.ne.s32.totalorder %s123, %s124
      %p133 = scmp.eq.s32.totalorder %s26, 0
      %p134 = por %p132, %p133
      %p135 = scmp.ne.s32.totalorder %s123, %s124
      %p136 = scmp.eq.s32.totalorder %s27, 1
      %p137 = por %p135, %p136
      %p139 = scmp.ne.s32.totalorder %s124, %s138
      %p140 = scmp.eq.s32.totalorder %s27, 0
      %p141 = por %p139, %p140
      %s142 = ssub.s32 %s29, %s36
      %p143 = scmp.eq.s32.totalorder %s142, 0
      %s145 = sadd.s32 %s144, 1
      %s146 = scalar_select %p143, %s144, %s145
      %p149 = pneg %p143
      %p150 = scmp.eq.s32.totalorder %s21, 1
      %p151 = por %p149, %p150
      %p152 = scmp.ne.s32.totalorder %s144, %s147
      %p153 = scmp.eq.s32.totalorder %s21, 0
      %p154 = por %p152, %p153
      %p155 = scmp.ne.s32.totalorder %s144, %s147
      %p156 = scmp.eq.s32.totalorder %s26, 1
      %p157 = por %p155, %p156
      %p158 = scmp.ne.s32.totalorder %s147, %s148
      %p159 = scmp.eq.s32.totalorder %s26, 0
      %p160 = por %p158, %p159
      %p161 = scmp.ne.s32.totalorder %s147, %s148
      %p162 = scmp.eq.s32.totalorder %s27, 1
      %p163 = por %p161, %p162
      %p165 = scmp.ne.s32.totalorder %s148, %s164
      %p166 = scmp.eq.s32.totalorder %s27, 0
      %p167 = por %p165, %p166
      %s169 = sadd.s32 %s168, 1
      %p172 = scmp.eq.s32.totalorder %s21, 1
      %p173 = scmp.ne.s32.totalorder %s168, %s170
      %p174 = scmp.eq.s32.totalorder %s21, 0
      %p175 = por %p173, %p174
      %p176 = scmp.ne.s32.totalorder %s168, %s170
      %p177 = scmp.eq.s32.totalorder %s26, 1
      %p178 = por %p176, %p177
      %p179 = scmp.ne.s32.totalorder %s170, %s171
      %p180 = scmp.eq.s32.totalorder %s26, 0
      %p181 = por %p179, %p180
      %p182 = scmp.ne.s32.totalorder %s170, %s171
      %p183 = scmp.eq.s32.totalorder %s27, 1
      %p184 = por %p182, %p183
      %p186 = scmp.ne.s32.totalorder %s171, %s185
      %p187 = scmp.eq.s32.totalorder %s27, 0
      %p188 = por %p186, %p187
      %s190 = sadd.s32 %s189, 1
      %p193 = scmp.eq.s32.totalorder %s21, 1
      %p194 = scmp.ne.s32.totalorder %s189, %s191
      %p195 = scmp.eq.s32.totalorder %s21, 0
      %p196 = por %p194, %p195
      %p197 = scmp.ne.s32.totalorder %s189, %s191
      %p198 = scmp.eq.s32.totalorder %s26, 1
      %p199 = por %p197, %p198
      %p200 = scmp.ne.s32.totalorder %s191, %s192
      %p201 = scmp.eq.s32.totalorder %s26, 0
      %p202 = por %p200, %p201
      %p203 = scmp.ne.s32.totalorder %s191, %s192
      %p204 = scmp.eq.s32.totalorder %s27, 1
      %p205 = por %p203, %p204
      %p207 = scmp.ne.s32.totalorder %s192, %s206
      %p208 = scmp.eq.s32.totalorder %s27, 0
      %p209 = por %p207, %p208
      %s211 = sadd.s32 %s210, 1
      %p214 = scmp.eq.s32.totalorder %s21, 1
      %p215 = scmp.ne.s32.totalorder %s210, %s212
      %p216 = scmp.eq.s32.totalorder %s21, 0
      %p217 = por %p215, %p216
      %p218 = scmp.ne.s32.totalorder %s210, %s212
      %p219 = scmp.eq.s32.totalorder %s26, 1
      %p220 = por %p218, %p219
      %p221 = scmp.ne.s32.totalorder %s212, %s213
      %p222 = scmp.eq.s32.totalorder %s26, 0
      %p223 = por %p221, %p222
      %p224 = scmp.ne.s32.totalorder %s212, %s213
      %p225 = scmp.eq.s32.totalorder %s27, 1
      %p226 = por %p224, %p225
      %p228 = scmp.ne.s32.totalorder %s213, %s227
      %p229 = scmp.eq.s32.totalorder %s27, 0
      %p230 = por %p228, %p229
      %s232 = sadd.s32 %s231, 1
      %p235 = scmp.eq.s32.totalorder %s21, 1
      %p236 = scmp.ne.s32.totalorder %s231, %s233
      %p237 = scmp.eq.s32.totalorder %s21, 0
      %p238 = por %p236, %p237
      %p239 = scmp.ne.s32.totalorder %s231, %s233
      %p240 = scmp.eq.s32.totalorder %s26, 1
      %p241 = por %p239, %p240
      %p242 = scmp.ne.s32.totalorder %s233, %s234
      %p243 = scmp.eq.s32.totalorder %s26, 0
      %p244 = por %p242, %p243
      %p245 = scmp.ne.s32.totalorder %s233, %s234
      %p246 = scmp.eq.s32.totalorder %s27, 1
      %p247 = por %p245, %p246
      %p249 = scmp.ne.s32.totalorder %s234, %s248
      %p250 = scmp.eq.s32.totalorder %s27, 0
      %p251 = por %p249, %p250
      %s252 = ssub.s32 %s28, %s40
      %s253 = ssub.s32 %s29, %s36
      %s254 = sor.u32 %s252, %s253
      %p255 = scmp.eq.s32.totalorder %s254, 0
      %s257 = sadd.s32 %s256, 1
      %s258 = scalar_select %p255, %s256, %s257
      %p261 = pneg %p255
      %p262 = scmp.eq.s32.totalorder %s21, 1
      %p263 = por %p261, %p262
      %p264 = scmp.ne.s32.totalorder %s256, %s259
      %p265 = scmp.eq.s32.totalorder %s21, 0
      %p266 = por %p264, %p265
      %p267 = scmp.ne.s32.totalorder %s256, %s259
      %p268 = scmp.eq.s32.totalorder %s26, 1
      %p269 = por %p267, %p268
      %p270 = scmp.ne.s32.totalorder %s259, %s260
      %p271 = scmp.eq.s32.totalorder %s26, 0
      %p272 = por %p270, %p271
      %p273 = scmp.ne.s32.totalorder %s259, %s260
      %p274 = scmp.eq.s32.totalorder %s27, 1
      %p275 = por %p273, %p274
      %p277 = scmp.ne.s32.totalorder %s260, %s276
      %p278 = scmp.eq.s32.totalorder %s27, 0
      %p279 = por %p277, %p278
      %p280 = scmp.le.s32.totalorder 1, %s21
      %p281 = scmp.lt.s32.totalorder %s21, 3
      %p282 = pnand %p280, %p281
      %p283 = pneg %p282
      // Predicated region
      $region9: #{tpu_custom_call.1} parent=5 // pred_check
        _
      $region10: #{tpu_custom_call.1} parent=5 // pred_check_branch
        %285 = sbr.rel (%p282) target = $region12
      $region11: #{tpu_custom_call.1} parent=5 // pred_region
        %s286 = ssub.s32 %s21, 1
        // Predicated region
        $region13: #{tpu_custom_call.1} parent=11 // pred_check
          %p287 = pneg %p113
        $region14: #{tpu_custom_call.1} parent=11 // pred_check_branch
          %289 = sbr.rel (%p287) target = $region16
        $region15: #{tpu_custom_call.1} parent=11 // pred_region
          %s290 = smul.u32 2, %s31
          %s292 = ssub.s32 128, 128
          %293 = vsyncadd [#allocation5], %s292
          %s294 = smul.addr %s290, 64
          %s295 = scalar_lea.hbm %s2, %s294
          %s296 = sshll.u32 [#allocation4], 4
          %s297 = int_to_ptr.vmem [resolvable:$true] %s296
          %302 = dma.hbm_to_vmem [thread:$0]  %s295, 128, %s297, [#allocation5], 64, 64, 4
        $region16: #{tpu_custom_call.1} parent=11 // pred_fallthru
          _
        // Predicated region
        $region17: #{tpu_custom_call.1} parent=11 // pred_check
          %p303 = pneg %p134
        $region18: #{tpu_custom_call.1} parent=11 // pred_check_branch
          %305 = sbr.rel (%p303) target = $region20
        $region19: #{tpu_custom_call.1} parent=11 // pred_region
          %s307 = ssub.s32 128, 128
          %308 = vsyncadd [#allocation8], %s307
          %s310 = sshll.u32 [#allocation7], 4
          %s311 = int_to_ptr.vmem [resolvable:$true] %s310
          %313 = dma.hbm_to_vmem [thread:$0]  %s3, 128, %s311, [#allocation8]
        $region20: #{tpu_custom_call.1} parent=11 // pred_fallthru
          _
        // Predicated region
        $region21: #{tpu_custom_call.1} parent=11 // pred_check
          %p314 = pneg %p160
        $region22: #{tpu_custom_call.1} parent=11 // pred_check_branch
          %316 = sbr.rel (%p314) target = $region24
        $region23: #{tpu_custom_call.1} parent=11 // pred_region
          %s317 = smul.u32 2, %s31
          %p318 = scmp.lt.s32.totalorder %s317, 1
          %s319 = scalar_select %p318, %s317, 1
          %s320 = smul.addr %s319, 4
          %s321 = scalar_lea.vmem %s4, %s320
          %s322 = smul.u32 2, %s31
        $region24: #{tpu_custom_call.1} parent=11 // pred_fallthru
          _
        // Predicated region
        $region25: #{tpu_custom_call.1} parent=11 // pred_check
          %p323 = pneg %p181
        $region26: #{tpu_custom_call.1} parent=11 // pred_check_branch
          %325 = sbr.rel (%p323) target = $region28
        $region27: #{tpu_custom_call.1} parent=11 // pred_region
          _
        $region28: #{tpu_custom_call.1} parent=11 // pred_fallthru
          _
        // Predicated region
        $region29: #{tpu_custom_call.1} parent=11 // pred_check
          %p326 = pneg %p202
        $region30: #{tpu_custom_call.1} parent=11 // pred_check_branch
          %328 = sbr.rel (%p326) target = $region32
        $region31: #{tpu_custom_call.1} parent=11 // pred_region
          %s330 = ssub.s32 256, 256
          %331 = vsyncadd [#allocation8], %s330
          %s332 = sshll.u32 [#allocation9], 4
          %s333 = int_to_ptr.vmem [resolvable:$true] %s332
          %338 = dma.hbm_to_vmem [thread:$0]  %s6, 256, %s333, [#allocation8], 64, 64, 4
        $region32: #{tpu_custom_call.1} parent=11 // pred_fallthru
          _
        // Predicated region
        $region33: #{tpu_custom_call.1} parent=11 // pred_check
          %p339 = pneg %p223
        $region34: #{tpu_custom_call.1} parent=11 // pred_check_branch
          %341 = sbr.rel (%p339) target = $region36
        $region35: #{tpu_custom_call.1} parent=11 // pred_region
          %s343 = ssub.s32 256, 256
          %344 = vsyncadd [#allocation11], %s343
          %s345 = sshll.u32 [#allocation10], 4
          %s346 = int_to_ptr.vmem [resolvable:$true] %s345
          %351 = dma.hbm_to_vmem [thread:$0]  %s7, 256, %s346, [#allocation11], 64, 64, 4
        $region36: #{tpu_custom_call.1} parent=11 // pred_fallthru
          _
        // Predicated region
        $region37: #{tpu_custom_call.1} parent=11 // pred_check
          %p352 = pneg %p244
        $region38: #{tpu_custom_call.1} parent=11 // pred_check_branch
          %354 = sbr.rel (%p352) target = $region40
        $region39: #{tpu_custom_call.1} parent=11 // pred_region
          _
        $region40: #{tpu_custom_call.1} parent=11 // pred_fallthru
          _
      $region12: #{tpu_custom_call.1} parent=5 // pred_fallthru
        _
      %p355 = scmp.lt.s32.totalorder %s21, 2
      // Predicated region
      $region41: #{tpu_custom_call.1} parent=5 // pred_check
        %p356 = pneg %p355
      $region42: #{tpu_custom_call.1} parent=5 // pred_check_branch
        %358 = sbr.rel (%p356) target = $region44
      $region43: #{tpu_custom_call.1} parent=5 // pred_region
        // Predicated region
        $region45: #{tpu_custom_call.1} parent=43 // pred_check
          %p359 = pneg %p55
        $region46: #{tpu_custom_call.1} parent=43 // pred_check_branch
          %361 = sbr.rel (%p359) target = $region48
        $region47: #{tpu_custom_call.1} parent=43 // pred_region
          %s362 = smul.u32 2, %s29
          %p363 = scmp.lt.s32.totalorder %s28, 1
          %s364 = scalar_select %p363, %s28, 1
          %p365 = scmp.lt.s32.totalorder %s362, 1
          %s366 = scalar_select %p365, %s362, 1
          %s367 = smul.addr %s364, 2
          %s368 = sadd.s32 %s366, %s367
          %s369 = smul.addr %s368, 8
          %s370 = scalar_lea.vmem %s0, %s369
          %s371 = smul.u32 2, %s29
        $region48: #{tpu_custom_call.1} parent=43 // pred_fallthru
          _
        // Predicated region
        $region49: #{tpu_custom_call.1} parent=43 // pred_check
          %p372 = pneg %p81
        $region50: #{tpu_custom_call.1} parent=43 // pred_check_branch
          %374 = sbr.rel (%p372) target = $region52
        $region51: #{tpu_custom_call.1} parent=43 // pred_region
          %p375 = scmp.lt.s32.totalorder %s28, 1
          %s376 = scalar_select %p375, %s28, 1
          %s377 = smul.addr %s376, 8
          %s378 = scalar_lea.vmem %s1, %s377
        $region52: #{tpu_custom_call.1} parent=43 // pred_fallthru
          _
      $region44: #{tpu_custom_call.1} parent=5 // pred_fallthru
        _
      %p379 = scmp.le.s32.totalorder 1, %s21
      %p380 = scmp.lt.s32.totalorder %s21, 3
      %p381 = pnand %p379, %p380
      %p382 = pneg %p381
      // Predicated region
      $region53: #{tpu_custom_call.1} parent=5 // pred_check
        _
      $region54: #{tpu_custom_call.1} parent=5 // pred_check_branch
        %384 = sbr.rel (%p381) target = $region56
      $region55: #{tpu_custom_call.1} parent=5 // pred_region
        %s385 = ssub.s32 %s21, 1
        // Predicated region
        $region57: #{tpu_custom_call.1} parent=55 // pred_check
          %p386 = pneg %p113
        $region58: #{tpu_custom_call.1} parent=55 // pred_check_branch
          %388 = sbr.rel (%p386) target = $region60
        $region59: #{tpu_custom_call.1} parent=55 // pred_region
          %389 = dma.done [#allocation5], 128
        $region60: #{tpu_custom_call.1} parent=55 // pred_fallthru
          _
        // Predicated region
        $region61: #{tpu_custom_call.1} parent=55 // pred_check
          %p390 = pneg %p134
        $region62: #{tpu_custom_call.1} parent=55 // pred_check_branch
          %392 = sbr.rel (%p390) target = $region64
        $region63: #{tpu_custom_call.1} parent=55 // pred_region
          %393 = dma.done [#allocation8], 128
        $region64: #{tpu_custom_call.1} parent=55 // pred_fallthru
          _
        // Predicated region
        $region65: #{tpu_custom_call.1} parent=55 // pred_check
          %p394 = pneg %p202
        $region66: #{tpu_custom_call.1} parent=55 // pred_check_branch
          %396 = sbr.rel (%p394) target = $region68
        $region67: #{tpu_custom_call.1} parent=55 // pred_region
          %397 = dma.done [#allocation8], 256
        $region68: #{tpu_custom_call.1} parent=55 // pred_fallthru
          _
        // Predicated region
        $region69: #{tpu_custom_call.1} parent=55 // pred_check
          %p398 = pneg %p223
        $region70: #{tpu_custom_call.1} parent=55 // pred_check_branch
          %400 = sbr.rel (%p398) target = $region72
        $region71: #{tpu_custom_call.1} parent=55 // pred_region
          %401 = dma.done [#allocation11], 256
        $region72: #{tpu_custom_call.1} parent=55 // pred_fallthru
          _
        %s402 = smul.u32 2, %s31
        %p403 = scmp.lt.s32.totalorder %s30, 1
        %s404 = scalar_select %p403, %s30, 1
        %p405 = scmp.lt.s32.totalorder %s402, 1
        %s406 = scalar_select %p405, %s402, 1
        %s407 = smul.addr %s404, 2
        %s408 = sadd.s32 %s406, %s407
        %s409 = smul.addr %s408, 8
        %s410 = scalar_lea.vmem %s0, %s409
        %p411 = pneg %p61
        %p412 = pneg %p58
        %p413 = scmp.lt.s32.totalorder %s30, 1
        %s414 = scalar_select %p413, %s30, 1
        %s415 = smul.addr %s414, 8
        %s416 = scalar_lea.vmem %s1, %s415
        %p417 = pneg %p87
        %p418 = pneg %p84
        %p419 = pneg %p113
        %p420 = pneg %p110
        %p421 = pneg %p134
        %p422 = pneg %p131
        %s423 = smul.u32 2, %s31
        %p424 = scmp.lt.s32.totalorder %s423, 1
        %s425 = scalar_select %p424, %s423, 1
        %s426 = smul.addr %s425, 4
        %s427 = scalar_lea.vmem %s4, %s426
        %p428 = pneg %p160
        %p429 = pneg %p157
        %p430 = pneg %p181
        %p431 = pneg %p178
        %p432 = pneg %p202
        %p433 = pneg %p199
        %p434 = pneg %p223
        %p435 = pneg %p220
        %p436 = pneg %p244
        %p437 = pneg %p241
        %p438 = pneg %p272
        %p439 = pneg %p269
        %s440 = sand.u32 %s259, 1
        %s441 = scalar_lea.sflag [#allocation6], %s440
        %s442 = sand.u32 %s259, 1
        %s443 = smul.addr %s442, 16
        %s444 = scalar_lea.vmem [#allocation12], %s443
        %s445 = smul.u32 2, %s31
        %p446 = scmp.lt.s32.totalorder %s30, 1
        %s447 = scalar_select %p446, %s30, 1
        %p448 = scmp.lt.s32.totalorder %s445, 1
        %s449 = scalar_select %p448, %s445, 1
        %s450 = smul.addr %s447, 2
        %s451 = sadd.s32 %s449, %s450
        %s452 = smul.addr %s451, 8
        %s453 = scalar_lea.vmem %s0, %s452
        %s454 = smul.u32 2, %s31
        %p455 = scmp.lt.s32.totalorder %s30, 1
        %s456 = scalar_select %p455, %s30, 1
        %s457 = smul.addr %s456, 8
        %s458 = scalar_lea.vmem %s1, %s457
        %s459 = smul.u32 2, %s31
        %s460 = smul.u32 2, %s31
        %p461 = scmp.lt.s32.totalorder %s460, 1
        %s462 = scalar_select %p461, %s460, 1
        %s463 = smul.addr %s462, 4
        %s464 = scalar_lea.vmem %s4, %s463
        %s465 = smul.u32 2, %s31
        %s466 = smul.u32 2, %s31
        %p468 = scmp.eq.s32.totalorder %s31, 0
        // Predicated region
        $region73: #{tpu_custom_call.1} parent=55 // pred_check
          %p469 = pneg %p468
        $region74: #{tpu_custom_call.1} parent=55 // pred_check_branch
          %471 = sbr.rel (%p469) target = $region76
        $region75: #{tpu_custom_call.1} parent=55 // pred_region
          %v472 = vld [vmem:[%s458] sm:$0xff]
          %v473 = vpack.c.bf16 %v472, %v472
          %v474 = vld [vmem:[#allocation9] sm:$0xf]
          %v475 = vld [vmem:[#allocation9 + $0x4] sm:$0xf]
          %v476 = vld [vmem:[#allocation9 + $0x8] sm:$0xf]
          %v477 = vld [vmem:[#allocation9 + $0xc] sm:$0xf]
          %v482 = vunpack.c.l.b16 %v474
          %v483 = vunpack.c.l.b16 %v475
          %v484 = vunpack.c.l.b16 %v476
          %v485 = vunpack.c.l.b16 %v477
          %v486 = vpack.c.b16 %v483, %v482
          %v487 = vpack.c.b16 %v485, %v484
          %vm490 = vcmask 261120
          %v492 = vsel %vm490, %v473, 0
          %494 = vmatprep.subr.bf16.mxu0 0
          %495 = vmatpush1.bf16.msra.mxu0 %v486
          %496 = vmatprep.subr.bf16.mxu0 0
          %497 = vmatpush1.bf16.msra.mxu0 %v487
          %498 = vmatprep.subr.bf16.mxu0 0
          %499 = vmatpush1.bf16.msra.mxu0 0
          %500 = vmatprep.subr.bf16.mxu0 0
          %501 = vmatpush1.bf16.msra.mxu0 0
          %502 = vmatprep.subr.bf16.mxu0 0
          %503 = vmatpush1.bf16.msra.mxu0 0
          %504 = vmatprep.subr.bf16.mxu0 0
          %505 = vmatpush1.bf16.msra.mxu0 0
          %506 = vmatprep.subr.bf16.mxu0 0
          %507 = vmatpush1.bf16.msra.mxu0 0
          %508 = vmatprep.subr.bf16.mxu0 0
          %509 = vmatpush1.bf16.msra.mxu0 0
          %510 = vmatprep.subr.bf16.mxu0 0
          %511 = vmatpush1.bf16.msra.mxu0 0
          %512 = vmatprep.subr.bf16.mxu0 0
          %513 = vmatpush1.bf16.msra.mxu0 0
          %514 = vmatprep.subr.bf16.mxu0 0
          %515 = vmatpush1.bf16.msra.mxu0 0
          %516 = vmatprep.subr.bf16.mxu0 0
          %517 = vmatpush1.bf16.msra.mxu0 0
          %518 = vmatprep.subr.bf16.mxu0 0
          %519 = vmatpush1.bf16.msra.mxu0 0
          %520 = vmatprep.subr.bf16.mxu0 0
          %521 = vmatpush1.bf16.msra.mxu0 0
          %522 = vmatprep.subr.bf16.mxu0 0
          %523 = vmatpush1.bf16.msra.mxu0 0
          %524 = vmatprep.subr.bf16.mxu0 0
          %525 = vmatpush1.bf16.msra.mxu0 0
          %526 = vmatprep.mubr.bf16.mxu0 0
          %527 = vmatmul.mubr.bf16.gmra.mrb[0].mxu0 %v492
          %v528 = vpop.f32.mrb[0].mxu0
          %v529 = vadd.f32 0.0, %v528
          %v530 = vpop.f32.mrb[0].mxu0
          %v531 = vpop.f32.mrb[0].mxu0
          %v532 = vpop.f32.mrb[0].mxu0
          %533 = vdwg.mxu0
          %v534 = vld [vmem:[#allocation7] sm:$0xff]
          %v535 = vadd.f32 %v529, %v534
          %v536 = vpack.c.bf16 %v535, %v535
          %v537 = vpack.c.bf16 %v529, %v529
          %539 = vrot.lane.b32.xlu0 %v536, 120
          %v540 = vpop.permute.xlu0 %539
          %541 = vrot.lane.b32.xlu0 %v536, 112
          %v542 = vpop.permute.xlu0 %541
          %543 = vrot.lane.b32.xlu0 %v536, 104
          %v544 = vpop.permute.xlu0 %543
          %v546 = vunpack.c.l.s4 1983009808
          %v547 = vunpack.c.0.s8 %v546
          %v548 = vlaneseq
          %v549 = vshrl.u32 %v548, 7
          %v550 = vsub.s32 %v547, %v549
          %v551 = vrot.slane %v536, %v550
          %v554 = vunpack.c.l.s4 1983009808
          %v555 = vunpack.c.0.s8 %v554
          %v556 = vlaneseq
          %v557 = vshrl.u32 %v556, 7
          %v558 = vsub.s32 %v555, %v557
          %v559 = vrot.slane %v542, %v558
          %v560 = vcombine.low %v551, %v559
          %v561 = vcombine.high %v551, %v559
          %v563 = vunpack.c.l.s4 1934713408
          %v564 = vunpack.c.0.s8 %v563
          %v565 = vlaneseq
          %v566 = vshrl.u32 %v565, 7
          %v567 = vsub.s32 %v564, %v566
          %v568 = vrot.slane %v560, %v567
          %v570 = vunpack.c.l.s4 1934713408
          %v571 = vunpack.c.0.s8 %v570
          %v572 = vlaneseq
          %v573 = vshrl.u32 %v572, 7
          %v574 = vsub.s32 %v571, %v573
          %v575 = vrot.slane %v561, %v574
          %v576 = vcombine.high %v568, 0
          %v577 = vcombine.high %v575, 0
          %v580 = vunpack.c.l.s4 1983009808
          %v581 = vunpack.c.0.s8 %v580
          %v582 = vlaneseq
          %v583 = vshrl.u32 %v582, 7
          %v584 = vsub.s32 %v581, %v583
          %v585 = vrot.slane %v540, %v584
          %v588 = vunpack.c.l.s4 1983009808
          %v589 = vunpack.c.0.s8 %v588
          %v590 = vlaneseq
          %v591 = vshrl.u32 %v590, 7
          %v592 = vsub.s32 %v589, %v591
          %v593 = vrot.slane %v544, %v592
          %v594 = vcombine.low %v585, %v593
          %v595 = vcombine.high %v585, %v593
          %v597 = vunpack.c.l.s4 1934713408
          %v598 = vunpack.c.0.s8 %v597
          %v599 = vlaneseq
          %v600 = vshrl.u32 %v599, 7
          %v601 = vsub.s32 %v598, %v600
          %v602 = vrot.slane %v594, %v601
          %v604 = vunpack.c.l.s4 1934713408
          %v605 = vunpack.c.0.s8 %v604
          %v606 = vlaneseq
          %v607 = vshrl.u32 %v606, 7
          %v608 = vsub.s32 %v605, %v607
          %v609 = vrot.slane %v595, %v608
          %v610 = vcombine.high %v602, 0
          %v611 = vcombine.high %v609, 0
          %v614 = vpack.i.b16 %v602, %v568
          %v616 = vshrl.u32 %v568, 16
          %v617 = vshrl.u32 %v602, 16
          %v618 = vpack.i.b16 %v617, %v616
          %v622 = vpack.i.b16 %v610, %v576
          %v624 = vshrl.u32 %v576, 16
          %v625 = vshrl.u32 %v610, 16
          %v626 = vpack.i.b16 %v625, %v624
          %v630 = vpack.i.b16 %v609, %v575
          %v632 = vshrl.u32 %v575, 16
          %v633 = vshrl.u32 %v609, 16
          %v634 = vpack.i.b16 %v633, %v632
          %v638 = vpack.i.b16 %v611, %v577
          %v640 = vshrl.u32 %v577, 16
          %v641 = vshrl.u32 %v611, 16
          %v642 = vpack.i.b16 %v641, %v640
          %v644 = vcombine.low %v614, %v630
          %v646 = vunpack.c.l.s4 1983009808
          %v647 = vunpack.c.0.s8 %v646
          %v648 = vlaneseq
          %v649 = vshrl.u32 %v648, 7
          %v650 = vsub.s32 %v647, %v649
          %v651 = vrot.slane %v644, %v650
          %v652 = vcombine.low %v622, %v638
          %v654 = vunpack.c.l.s4 1983009808
          %v655 = vunpack.c.0.s8 %v654
          %v656 = vlaneseq
          %v657 = vshrl.u32 %v656, 7
          %v658 = vsub.s32 %v655, %v657
          %v659 = vrot.slane %v652, %v658
          %v660 = vcombine.low %v651, %v659
          %v662 = vunpack.c.l.s4 1934713408
          %v663 = vunpack.c.0.s8 %v662
          %v664 = vlaneseq
          %v665 = vshrl.u32 %v664, 7
          %v666 = vsub.s32 %v663, %v665
          %v667 = vrot.slane %v660, %v666
          %v668 = vcombine.high %v667, 0
          %v669 = vcombine.low %v618, %v634
          %v671 = vunpack.c.l.s4 1983009808
          %v672 = vunpack.c.0.s8 %v671
          %v673 = vlaneseq
          %v674 = vshrl.u32 %v673, 7
          %v675 = vsub.s32 %v672, %v674
          %v676 = vrot.slane %v669, %v675
          %v677 = vcombine.low %v626, %v642
          %v679 = vunpack.c.l.s4 1983009808
          %v680 = vunpack.c.0.s8 %v679
          %v681 = vlaneseq
          %v682 = vshrl.u32 %v681, 7
          %v683 = vsub.s32 %v680, %v682
          %v684 = vrot.slane %v677, %v683
          %v685 = vcombine.low %v676, %v684
          %v687 = vunpack.c.l.s4 1934713408
          %v688 = vunpack.c.0.s8 %v687
          %v689 = vlaneseq
          %v690 = vshrl.u32 %v689, 7
          %v691 = vsub.s32 %v688, %v690
          %v692 = vrot.slane %v685, %v691
          %v693 = vcombine.high %v692, 0
          %v696 = vpack.i.b16 %v692, %v667
          %v698 = vshrl.u32 %v667, 16
          %v699 = vshrl.u32 %v692, 16
          %v700 = vpack.i.b16 %v699, %v698
          %v704 = vpack.i.b16 %v693, %v668
          %v706 = vshrl.u32 %v668, 16
          %v707 = vshrl.u32 %v693, 16
          %v708 = vpack.i.b16 %v707, %v706
          %vm710 = vcmask 60416
          %711 = vst.msk [vmem:[#allocation2] sm:$0xf] %vm710, %v696
          %712 = vst.msk [vmem:[#allocation2 + $0x4] sm:$0xf] %vm710, %v700
          %713 = vst.msk [vmem:[#allocation2 + $0x8] sm:$0xf] %vm710, %v704
          %714 = vst.msk [vmem:[#allocation2 + $0xc] sm:$0xf] %vm710, %v708
          %716 = vrot.lane.b32.xlu0 %v537, 120
          %v717 = vpop.permute.xlu0 %716
          %718 = vrot.lane.b32.xlu0 %v537, 112
          %v719 = vpop.permute.xlu0 %718
          %720 = vrot.lane.b32.xlu0 %v537, 104
          %v721 = vpop.permute.xlu0 %720
          %722 = vrot.lane.b32.xlu0 %v537, 96
          %v723 = vpop.permute.xlu0 %722
          %724 = vrot.lane.b32.xlu0 %v717, 96
          %v725 = vpop.permute.xlu0 %724
          %726 = vrot.lane.b32.xlu0 %v719, 96
          %v727 = vpop.permute.xlu0 %726
          %728 = vrot.lane.b32.xlu0 %v721, 96
          %v729 = vpop.permute.xlu0 %728
          %v732 = vunpack.c.l.s4 1983009808
          %v733 = vunpack.c.0.s8 %v732
          %v734 = vlaneseq
          %v735 = vshrl.u32 %v734, 7
          %v736 = vsub.s32 %v733, %v735
          %v737 = vrot.slane %v723, %v736
          %v740 = vunpack.c.l.s4 1983009808
          %v741 = vunpack.c.0.s8 %v740
          %v742 = vlaneseq
          %v743 = vshrl.u32 %v742, 7
          %v744 = vsub.s32 %v741, %v743
          %v745 = vrot.slane %v727, %v744
          %v746 = vcombine.low %v737, %v745
          %v747 = vcombine.high %v737, %v745
          %v749 = vunpack.c.l.s4 1934713408
          %v750 = vunpack.c.0.s8 %v749
          %v751 = vlaneseq
          %v752 = vshrl.u32 %v751, 7
          %v753 = vsub.s32 %v750, %v752
          %v754 = vrot.slane %v746, %v753
          %v756 = vunpack.c.l.s4 1934713408
          %v757 = vunpack.c.0.s8 %v756
          %v758 = vlaneseq
          %v759 = vshrl.u32 %v758, 7
          %v760 = vsub.s32 %v757, %v759
          %v761 = vrot.slane %v747, %v760
          %v762 = vcombine.high %v754, 0
          %v763 = vcombine.high %v761, 0
          %v766 = vunpack.c.l.s4 1983009808
          %v767 = vunpack.c.0.s8 %v766
          %v768 = vlaneseq
          %v769 = vshrl.u32 %v768, 7
          %v770 = vsub.s32 %v767, %v769
          %v771 = vrot.slane %v725, %v770
          %v774 = vunpack.c.l.s4 1983009808
          %v775 = vunpack.c.0.s8 %v774
          %v776 = vlaneseq
          %v777 = vshrl.u32 %v776, 7
          %v778 = vsub.s32 %v775, %v777
          %v779 = vrot.slane %v729, %v778
          %v780 = vcombine.low %v771, %v779
          %v781 = vcombine.high %v771, %v779
          %v783 = vunpack.c.l.s4 1934713408
          %v784 = vunpack.c.0.s8 %v783
          %v785 = vlaneseq
          %v786 = vshrl.u32 %v785, 7
          %v787 = vsub.s32 %v784, %v786
          %v788 = vrot.slane %v780, %v787
          %v790 = vunpack.c.l.s4 1934713408
          %v791 = vunpack.c.0.s8 %v790
          %v792 = vlaneseq
          %v793 = vshrl.u32 %v792, 7
          %v794 = vsub.s32 %v791, %v793
          %v795 = vrot.slane %v781, %v794
          %v796 = vcombine.high %v788, 0
          %v797 = vcombine.high %v795, 0
          %v800 = vpack.i.b16 %v788, %v754
          %v802 = vshrl.u32 %v754, 16
          %v803 = vshrl.u32 %v788, 16
          %v804 = vpack.i.b16 %v803, %v802
          %v808 = vpack.i.b16 %v796, %v762
          %v810 = vshrl.u32 %v762, 16
          %v811 = vshrl.u32 %v796, 16
          %v812 = vpack.i.b16 %v811, %v810
          %v816 = vpack.i.b16 %v795, %v761
          %v818 = vshrl.u32 %v761, 16
          %v819 = vshrl.u32 %v795, 16
          %v820 = vpack.i.b16 %v819, %v818
          %v824 = vpack.i.b16 %v797, %v763
          %v826 = vshrl.u32 %v763, 16
          %v827 = vshrl.u32 %v797, 16
          %v828 = vpack.i.b16 %v827, %v826
          %v830 = vcombine.low %v800, %v816
          %v832 = vunpack.c.l.s4 1983009808
          %v833 = vunpack.c.0.s8 %v832
          %v834 = vlaneseq
          %v835 = vshrl.u32 %v834, 7
          %v836 = vsub.s32 %v833, %v835
          %v837 = vrot.slane %v830, %v836
          %v838 = vcombine.low %v808, %v824
          %v840 = vunpack.c.l.s4 1983009808
          %v841 = vunpack.c.0.s8 %v840
          %v842 = vlaneseq
          %v843 = vshrl.u32 %v842, 7
          %v844 = vsub.s32 %v841, %v843
          %v845 = vrot.slane %v838, %v844
          %v846 = vcombine.low %v837, %v845
          %v848 = vunpack.c.l.s4 1934713408
          %v849 = vunpack.c.0.s8 %v848
          %v850 = vlaneseq
          %v851 = vshrl.u32 %v850, 7
          %v852 = vsub.s32 %v849, %v851
          %v853 = vrot.slane %v846, %v852
          %v854 = vcombine.high %v853, 0
          %v855 = vcombine.low %v804, %v820
          %v857 = vunpack.c.l.s4 1983009808
          %v858 = vunpack.c.0.s8 %v857
          %v859 = vlaneseq
          %v860 = vshrl.u32 %v859, 7
          %v861 = vsub.s32 %v858, %v860
          %v862 = vrot.slane %v855, %v861
          %v863 = vcombine.low %v812, %v828
          %v865 = vunpack.c.l.s4 1983009808
          %v866 = vunpack.c.0.s8 %v865
          %v867 = vlaneseq
          %v868 = vshrl.u32 %v867, 7
          %v869 = vsub.s32 %v866, %v868
          %v870 = vrot.slane %v863, %v869
          %v871 = vcombine.low %v862, %v870
          %v873 = vunpack.c.l.s4 1934713408
          %v874 = vunpack.c.0.s8 %v873
          %v875 = vlaneseq
          %v876 = vshrl.u32 %v875, 7
          %v877 = vsub.s32 %v874, %v876
          %v878 = vrot.slane %v871, %v877
          %v879 = vcombine.high %v878, 0
          %v882 = vpack.i.b16 %v878, %v853
          %v884 = vshrl.u32 %v853, 16
          %v885 = vshrl.u32 %v878, 16
          %v886 = vpack.i.b16 %v885, %v884
          %v890 = vpack.i.b16 %v879, %v854
          %v892 = vshrl.u32 %v854, 16
          %v893 = vshrl.u32 %v879, 16
          %v894 = vpack.i.b16 %v893, %v892
          %896 = vst.msk [vmem:[#allocation3] sm:$0xf] %vm710, %v882
          %897 = vst.msk [vmem:[#allocation3 + $0x4] sm:$0xf] %vm710, %v886
          %898 = vst.msk [vmem:[#allocation3 + $0x8] sm:$0xf] %vm710, %v890
          %899 = vst.msk [vmem:[#allocation3 + $0xc] sm:$0xf] %vm710, %v894
        $region76: #{tpu_custom_call.1} parent=55 // pred_fallthru
          _
        %v900 = vld [vmem:[%s453] sm:$0xff]
        %v901 = vld [vmem:[%s453 + $0x8] sm:$0xff]
        %v902 = vld [vmem:[#allocation4] sm:$0xf]
        %v903 = vld [vmem:[#allocation4 + $0x4] sm:$0xf]
        %v904 = vunpack.c.l.bf16 %v902
        %v905 = vunpack.c.l.bf16 %v903
        %v906 = vadd.f32 %v900, %v904
        %v907 = vadd.f32 %v901, %v905
        %v908 = vpack.c.bf16 %v907, %v906
        %v909 = vld [vmem:[%s5] sm:$0xf]
        %v910 = vld [vmem:[%s5 + $0x4] sm:$0xf]
        %v911 = vld [vmem:[%s5 + $0x8] sm:$0xf]
        %v912 = vld [vmem:[%s5 + $0xc] sm:$0xf]
        %v917 = vunpack.c.l.b16 %v909
        %v918 = vunpack.c.l.b16 %v910
        %v919 = vunpack.c.l.b16 %v911
        %v920 = vunpack.c.l.b16 %v912
        %v921 = vpack.c.b16 %v918, %v917
        %v922 = vpack.c.b16 %v920, %v919
        %vm925 = vcmask 261120
        %v927 = vsel %vm925, %v908, 0
        %929 = vmatprep.subr.bf16.mxu0 0
        %930 = vmatpush1.bf16.msra.mxu0 %v921
        %931 = vmatprep.subr.bf16.mxu0 0
        %932 = vmatpush1.bf16.msra.mxu0 %v922
        %933 = vmatprep.subr.bf16.mxu0 0
        %934 = vmatpush1.bf16.msra.mxu0 0
        %935 = vmatprep.subr.bf16.mxu0 0
        %936 = vmatpush1.bf16.msra.mxu0 0
        %937 = vmatprep.subr.bf16.mxu0 0
        %938 = vmatpush1.bf16.msra.mxu0 0
        %939 = vmatprep.subr.bf16.mxu0 0
        %940 = vmatpush1.bf16.msra.mxu0 0
        %941 = vmatprep.subr.bf16.mxu0 0
        %942 = vmatpush1.bf16.msra.mxu0 0
        %943 = vmatprep.subr.bf16.mxu0 0
        %944 = vmatpush1.bf16.msra.mxu0 0
        %945 = vmatprep.subr.bf16.mxu0 0
        %946 = vmatpush1.bf16.msra.mxu0 0
        %947 = vmatprep.subr.bf16.mxu0 0
        %948 = vmatpush1.bf16.msra.mxu0 0
        %949 = vmatprep.subr.bf16.mxu0 0
        %950 = vmatpush1.bf16.msra.mxu0 0
        %951 = vmatprep.subr.bf16.mxu0 0
        %952 = vmatpush1.bf16.msra.mxu0 0
        %953 = vmatprep.subr.bf16.mxu0 0
        %954 = vmatpush1.bf16.msra.mxu0 0
        %955 = vmatprep.subr.bf16.mxu0 0
        %956 = vmatpush1.bf16.msra.mxu0 0
        %957 = vmatprep.subr.bf16.mxu0 0
        %958 = vmatpush1.bf16.msra.mxu0 0
        %959 = vmatprep.subr.bf16.mxu0 0
        %960 = vmatpush1.bf16.msra.mxu0 0
        %961 = vmatprep.mubr.bf16.mxu0 0
        %962 = vmatmul.mubr.bf16.gmra.mrb[0].mxu0 %v927
        %v963 = vpop.f32.mrb[0].mxu0
        %v964 = vadd.f32 0.0, %v963
        %v965 = vpop.f32.mrb[0].mxu0
        %v966 = vpop.f32.mrb[0].mxu0
        %v967 = vadd.f32 0.0, %v966
        %v968 = vpop.f32.mrb[0].mxu0
        %969 = vdwg.mxu0
        %v970 = vpack.c.bf16 %v967, %v964
        %972 = vrot.lane.b32.xlu0 %v970, 120
        %v973 = vpop.permute.xlu0 %972
        %974 = vrot.lane.b32.xlu0 %v970, 112
        %v975 = vpop.permute.xlu0 %974
        %976 = vrot.lane.b32.xlu0 %v970, 104
        %v977 = vpop.permute.xlu0 %976
        %v980 = vpack.i.b16 %v973, %v970
        %v982 = vshrl.u32 %v970, 16
        %v983 = vshrl.u32 %v973, 16
        %v984 = vpack.i.b16 %v983, %v982
        %v988 = vpack.i.b16 %v977, %v975
        %v990 = vshrl.u32 %v975, 16
        %v991 = vshrl.u32 %v977, 16
        %v992 = vpack.i.b16 %v991, %v990
        %v995 = vpack.i.b16 0, 0
        %v997 = vshrl.u32 0, 16
        %v998 = vpack.i.b16 %v997, %v997
        %v1000 = vcombine.high %v980, %v995
        %v1002 = vunpack.c.l.s4 1983009808
        %v1003 = vunpack.c.0.s8 %v1002
        %v1004 = vlaneseq
        %v1005 = vshrl.u32 %v1004, 7
        %v1006 = vsub.s32 %v1003, %v1005
        %v1007 = vrot.slane %v980, %v1006
        %v1009 = vunpack.c.l.s4 1983009808
        %v1010 = vunpack.c.0.s8 %v1009
        %v1011 = vlaneseq
        %v1012 = vshrl.u32 %v1011, 7
        %v1013 = vsub.s32 %v1010, %v1012
        %v1014 = vrot.slane %v1000, %v1013
        %v1015 = vcombine.high %v988, %v995
        %v1017 = vunpack.c.l.s4 1983009808
        %v1018 = vunpack.c.0.s8 %v1017
        %v1019 = vlaneseq
        %v1020 = vshrl.u32 %v1019, 7
        %v1021 = vsub.s32 %v1018, %v1020
        %v1022 = vrot.slane %v988, %v1021
        %v1024 = vunpack.c.l.s4 1983009808
        %v1025 = vunpack.c.0.s8 %v1024
        %v1026 = vlaneseq
        %v1027 = vshrl.u32 %v1026, 7
        %v1028 = vsub.s32 %v1025, %v1027
        %v1029 = vrot.slane %v1015, %v1028
        %v1030 = vcombine.low %v1007, %v1022
        %v1031 = vcombine.high %v1007, %v1022
        %v1033 = vunpack.c.l.s4 1934713408
        %v1034 = vunpack.c.0.s8 %v1033
        %v1035 = vlaneseq
        %v1036 = vshrl.u32 %v1035, 7
        %v1037 = vsub.s32 %v1034, %v1036
        %v1038 = vrot.slane %v1030, %v1037
        %v1040 = vunpack.c.l.s4 1934713408
        %v1041 = vunpack.c.0.s8 %v1040
        %v1042 = vlaneseq
        %v1043 = vshrl.u32 %v1042, 7
        %v1044 = vsub.s32 %v1041, %v1043
        %v1045 = vrot.slane %v1031, %v1044
        %v1046 = vcombine.low %v1014, %v1029
        %v1047 = vcombine.high %v1014, %v1029
        %v1049 = vunpack.c.l.s4 1934713408
        %v1050 = vunpack.c.0.s8 %v1049
        %v1051 = vlaneseq
        %v1052 = vshrl.u32 %v1051, 7
        %v1053 = vsub.s32 %v1050, %v1052
        %v1054 = vrot.slane %v1046, %v1053
        %v1056 = vunpack.c.l.s4 1934713408
        %v1057 = vunpack.c.0.s8 %v1056
        %v1058 = vlaneseq
        %v1059 = vshrl.u32 %v1058, 7
        %v1060 = vsub.s32 %v1057, %v1059
        %v1061 = vrot.slane %v1047, %v1060
        %v1062 = vcombine.high %v1038, 0
        %v1063 = vcombine.high %v1045, 0
        %v1064 = vcombine.high %v1054, 0
        %v1065 = vcombine.high %v1061, 0
        %v1066 = vcombine.high %v984, %v998
        %v1068 = vunpack.c.l.s4 1983009808
        %v1069 = vunpack.c.0.s8 %v1068
        %v1070 = vlaneseq
        %v1071 = vshrl.u32 %v1070, 7
        %v1072 = vsub.s32 %v1069, %v1071
        %v1073 = vrot.slane %v984, %v1072
        %v1075 = vunpack.c.l.s4 1983009808
        %v1076 = vunpack.c.0.s8 %v1075
        %v1077 = vlaneseq
        %v1078 = vshrl.u32 %v1077, 7
        %v1079 = vsub.s32 %v1076, %v1078
        %v1080 = vrot.slane %v1066, %v1079
        %v1081 = vcombine.high %v992, %v998
        %v1083 = vunpack.c.l.s4 1983009808
        %v1084 = vunpack.c.0.s8 %v1083
        %v1085 = vlaneseq
        %v1086 = vshrl.u32 %v1085, 7
        %v1087 = vsub.s32 %v1084, %v1086
        %v1088 = vrot.slane %v992, %v1087
        %v1090 = vunpack.c.l.s4 1983009808
        %v1091 = vunpack.c.0.s8 %v1090
        %v1092 = vlaneseq
        %v1093 = vshrl.u32 %v1092, 7
        %v1094 = vsub.s32 %v1091, %v1093
        %v1095 = vrot.slane %v1081, %v1094
        %v1096 = vcombine.low %v1073, %v1088
        %v1097 = vcombine.high %v1073, %v1088
        %v1099 = vunpack.c.l.s4 1934713408
        %v1100 = vunpack.c.0.s8 %v1099
        %v1101 = vlaneseq
        %v1102 = vshrl.u32 %v1101, 7
        %v1103 = vsub.s32 %v1100, %v1102
        %v1104 = vrot.slane %v1096, %v1103
        %v1106 = vunpack.c.l.s4 1934713408
        %v1107 = vunpack.c.0.s8 %v1106
        %v1108 = vlaneseq
        %v1109 = vshrl.u32 %v1108, 7
        %v1110 = vsub.s32 %v1107, %v1109
        %v1111 = vrot.slane %v1097, %v1110
        %v1112 = vcombine.low %v1080, %v1095
        %v1113 = vcombine.high %v1080, %v1095
        %v1115 = vunpack.c.l.s4 1934713408
        %v1116 = vunpack.c.0.s8 %v1115
        %v1117 = vlaneseq
        %v1118 = vshrl.u32 %v1117, 7
        %v1119 = vsub.s32 %v1116, %v1118
        %v1120 = vrot.slane %v1112, %v1119
        %v1122 = vunpack.c.l.s4 1934713408
        %v1123 = vunpack.c.0.s8 %v1122
        %v1124 = vlaneseq
        %v1125 = vshrl.u32 %v1124, 7
        %v1126 = vsub.s32 %v1123, %v1125
        %v1127 = vrot.slane %v1113, %v1126
        %v1128 = vcombine.high %v1104, 0
        %v1129 = vcombine.high %v1111, 0
        %v1130 = vcombine.high %v1120, 0
        %v1131 = vcombine.high %v1127, 0
        %v1132 = vcombine.low %v1038, %v1045
        %v1134 = vunpack.c.l.s4 1983009808
        %v1135 = vunpack.c.0.s8 %v1134
        %v1136 = vlaneseq
        %v1137 = vshrl.u32 %v1136, 7
        %v1138 = vsub.s32 %v1135, %v1137
        %v1139 = vrot.slane %v1132, %v1138
        %v1140 = vcombine.low %v1062, %v1063
        %v1142 = vunpack.c.l.s4 1983009808
        %v1143 = vunpack.c.0.s8 %v1142
        %v1144 = vlaneseq
        %v1145 = vshrl.u32 %v1144, 7
        %v1146 = vsub.s32 %v1143, %v1145
        %v1147 = vrot.slane %v1140, %v1146
        %v1148 = vcombine.low %v1054, %v1061
        %v1150 = vunpack.c.l.s4 1983009808
        %v1151 = vunpack.c.0.s8 %v1150
        %v1152 = vlaneseq
        %v1153 = vshrl.u32 %v1152, 7
        %v1154 = vsub.s32 %v1151, %v1153
        %v1155 = vrot.slane %v1148, %v1154
        %v1156 = vcombine.low %v1064, %v1065
        %v1158 = vunpack.c.l.s4 1983009808
        %v1159 = vunpack.c.0.s8 %v1158
        %v1160 = vlaneseq
        %v1161 = vshrl.u32 %v1160, 7
        %v1162 = vsub.s32 %v1159, %v1161
        %v1163 = vrot.slane %v1156, %v1162
        %v1164 = vcombine.low %v1139, %v1147
        %v1166 = vunpack.c.l.s4 1934713408
        %v1167 = vunpack.c.0.s8 %v1166
        %v1168 = vlaneseq
        %v1169 = vshrl.u32 %v1168, 7
        %v1170 = vsub.s32 %v1167, %v1169
        %v1171 = vrot.slane %v1164, %v1170
        %v1172 = vcombine.low %v1155, %v1163
        %v1174 = vunpack.c.l.s4 1934713408
        %v1175 = vunpack.c.0.s8 %v1174
        %v1176 = vlaneseq
        %v1177 = vshrl.u32 %v1176, 7
        %v1178 = vsub.s32 %v1175, %v1177
        %v1179 = vrot.slane %v1172, %v1178
        %v1180 = vcombine.low %v1171, %v1179
        %v1181 = vcombine.high %v1171, %v1179
        %v1182 = vcombine.low %v1104, %v1111
        %v1184 = vunpack.c.l.s4 1983009808
        %v1185 = vunpack.c.0.s8 %v1184
        %v1186 = vlaneseq
        %v1187 = vshrl.u32 %v1186, 7
        %v1188 = vsub.s32 %v1185, %v1187
        %v1189 = vrot.slane %v1182, %v1188
        %v1190 = vcombine.low %v1128, %v1129
        %v1192 = vunpack.c.l.s4 1983009808
        %v1193 = vunpack.c.0.s8 %v1192
        %v1194 = vlaneseq
        %v1195 = vshrl.u32 %v1194, 7
        %v1196 = vsub.s32 %v1193, %v1195
        %v1197 = vrot.slane %v1190, %v1196
        %v1198 = vcombine.low %v1120, %v1127
        %v1200 = vunpack.c.l.s4 1983009808
        %v1201 = vunpack.c.0.s8 %v1200
        %v1202 = vlaneseq
        %v1203 = vshrl.u32 %v1202, 7
        %v1204 = vsub.s32 %v1201, %v1203
        %v1205 = vrot.slane %v1198, %v1204
        %v1206 = vcombine.low %v1130, %v1131
        %v1208 = vunpack.c.l.s4 1983009808
        %v1209 = vunpack.c.0.s8 %v1208
        %v1210 = vlaneseq
        %v1211 = vshrl.u32 %v1210, 7
        %v1212 = vsub.s32 %v1209, %v1211
        %v1213 = vrot.slane %v1206, %v1212
        %v1214 = vcombine.low %v1189, %v1197
        %v1216 = vunpack.c.l.s4 1934713408
        %v1217 = vunpack.c.0.s8 %v1216
        %v1218 = vlaneseq
        %v1219 = vshrl.u32 %v1218, 7
        %v1220 = vsub.s32 %v1217, %v1219
        %v1221 = vrot.slane %v1214, %v1220
        %v1222 = vcombine.low %v1205, %v1213
        %v1224 = vunpack.c.l.s4 1934713408
        %v1225 = vunpack.c.0.s8 %v1224
        %v1226 = vlaneseq
        %v1227 = vshrl.u32 %v1226, 7
        %v1228 = vsub.s32 %v1225, %v1227
        %v1229 = vrot.slane %v1222, %v1228
        %v1230 = vcombine.low %v1221, %v1229
        %v1231 = vcombine.high %v1221, %v1229
        %v1234 = vpack.i.b16 %v1230, %v1180
        %v1235 = vshrl.u32 %v1180, 16
        %v1236 = vshrl.u32 %v1230, 16
        %v1237 = vpack.i.b16 %v1236, %v1235
        %v1240 = vpack.i.b16 %v1231, %v1181
        %v1241 = vshrl.u32 %v1181, 16
        %v1242 = vshrl.u32 %v1231, 16
        %v1243 = vpack.i.b16 %v1242, %v1241
        %v1244 = vld [vmem:[#allocation2] sm:$0xf]
        %v1245 = vld [vmem:[#allocation2 + $0x4] sm:$0xf]
        %v1246 = vld [vmem:[#allocation2 + $0x8] sm:$0xf]
        %v1247 = vld [vmem:[#allocation2 + $0xc] sm:$0xf]
        %v1248 = vld [vmem:[%s464] sm:$0xf]
        %v1249 = vld [vmem:[%s464 + $0x4] sm:$0xf]
        %v1250 = vld [vmem:[%s464 + $0x8] sm:$0xf]
        %v1251 = vld [vmem:[%s464 + $0xc] sm:$0xf]
        %v1252 = vld [vmem:[%s464 + $0x10] sm:$0xf]
        %v1253 = vld [vmem:[%s464 + $0x14] sm:$0xf]
        %v1254 = vld [vmem:[%s464 + $0x18] sm:$0xf]
        %v1255 = vld [vmem:[%s464 + $0x1c] sm:$0xf]
        %v1256 = vunpack.c.l.bf16 %v1248
        %v1257 = vunpack.c.l.bf16 %v1249
        %v1258 = vunpack.c.l.bf16 %v1250
        %v1259 = vunpack.c.l.bf16 %v1251
        %v1260 = vunpack.c.l.bf16 %v1252
        %v1261 = vunpack.c.l.bf16 %v1253
        %v1262 = vunpack.c.l.bf16 %v1254
        %v1263 = vunpack.c.l.bf16 %v1255
        %vm1264 = vcmask 64512
        %v1266 = vsel %vm1264, %v1234, 0
        %v1269 = vsel %vm1264, %v1244, 0
        %1271 = vmatprep.subr.bf16.mxu0 0
        %1272 = vmatpush1.bf16.xpose.msra.mxu0 %v1269
        %1273 = vmatprep.subr.bf16.mxu0 0
        %1274 = vmatpush1.bf16.xpose.msra.mxu0 0
        %1275 = vmatprep.subr.bf16.mxu0 0
        %1276 = vmatpush1.bf16.xpose.msra.mxu0 0
        %1277 = vmatprep.subr.bf16.mxu0 0
        %1278 = vmatpush1.bf16.xpose.msra.mxu0 0
        %1279 = vmatprep.subr.bf16.mxu0 0
        %1280 = vmatpush1.bf16.xpose.msra.mxu0 0
        %1281 = vmatprep.subr.bf16.mxu0 0
        %1282 = vmatpush1.bf16.xpose.msra.mxu0 0
        %1283 = vmatprep.subr.bf16.mxu0 0
        %1284 = vmatpush1.bf16.xpose.msra.mxu0 0
        %1285 = vmatprep.subr.bf16.mxu0 0
        %1286 = vmatpush1.bf16.xpose.msra.mxu0 0
        %1287 = vmatprep.subr.bf16.mxu0 0
        %1288 = vmatpush1.bf16.xpose.msra.mxu0 0
        %1289 = vmatprep.subr.bf16.mxu0 0
        %1290 = vmatpush1.bf16.xpose.msra.mxu0 0
        %1291 = vmatprep.subr.bf16.mxu0 0
        %1292 = vmatpush1.bf16.xpose.msra.mxu0 0
        %1293 = vmatprep.subr.bf16.mxu0 0
        %1294 = vmatpush1.bf16.xpose.msra.mxu0 0
        %1295 = vmatprep.subr.bf16.mxu0 0
        %1296 = vmatpush1.bf16.xpose.msra.mxu0 0
        %1297 = vmatprep.subr.bf16.mxu0 0
        %1298 = vmatpush1.bf16.xpose.msra.mxu0 0
        %1299 = vmatprep.subr.bf16.mxu0 0
        %1300 = vmatpush1.bf16.xpose.msra.mxu0 0
        %1301 = vmatprep.subr.bf16.mxu0 0
        %1302 = vmatpush1.bf16.xpose.msra.mxu0 0
        %1303 = vmatprep.mubr.bf16.mxu0 0
        %1304 = vmatmul.mubr.bf16.gmra.mrb[0].mxu0 %v1266
        %v1305 = vpop.f32.mrb[0].mxu0
        %v1306 = vadd.f32 %v1256, %v1305
        %v1307 = vpop.f32.mrb[0].mxu0
        %v1308 = vpop.f32.mrb[0].mxu0
        %v1309 = vadd.f32 %v1257, %v1308
        %v1310 = vpop.f32.mrb[0].mxu0
        %1311 = vdwg.mxu0
        %v1313 = vsel %vm1264, %v1237, 0
        %v1316 = vsel %vm1264, %v1245, 0
        %1318 = vmatprep.subr.bf16.mxu0 0
        %1319 = vmatpush1.bf16.xpose.msra.mxu0 %v1316
        %1320 = vmatprep.subr.bf16.mxu0 0
        %1321 = vmatpush1.bf16.xpose.msra.mxu0 0
        %1322 = vmatprep.subr.bf16.mxu0 0
        %1323 = vmatpush1.bf16.xpose.msra.mxu0 0
        %1324 = vmatprep.subr.bf16.mxu0 0
        %1325 = vmatpush1.bf16.xpose.msra.mxu0 0
        %1326 = vmatprep.subr.bf16.mxu0 0
        %1327 = vmatpush1.bf16.xpose.msra.mxu0 0
        %1328 = vmatprep.subr.bf16.mxu0 0
        %1329 = vmatpush1.bf16.xpose.msra.mxu0 0
        %1330 = vmatprep.subr.bf16.mxu0 0
        %1331 = vmatpush1.bf16.xpose.msra.mxu0 0
        %1332 = vmatprep.subr.bf16.mxu0 0
        %1333 = vmatpush1.bf16.xpose.msra.mxu0 0
        %1334 = vmatprep.subr.bf16.mxu0 0
        %1335 = vmatpush1.bf16.xpose.msra.mxu0 0
        %1336 = vmatprep.subr.bf16.mxu0 0
        %1337 = vmatpush1.bf16.xpose.msra.mxu0 0
        %1338 = vmatprep.subr.bf16.mxu0 0
        %1339 = vmatpush1.bf16.xpose.msra.mxu0 0
        %1340 = vmatprep.subr.bf16.mxu0 0
        %1341 = vmatpush1.bf16.xpose.msra.mxu0 0
        %1342 = vmatprep.subr.bf16.mxu0 0
        %1343 = vmatpush1.bf16.xpose.msra.mxu0 0
        %1344 = vmatprep.subr.bf16.mxu0 0
        %1345 = vmatpush1.bf16.xpose.msra.mxu0 0
        %1346 = vmatprep.subr.bf16.mxu0 0
        %1347 = vmatpush1.bf16.xpose.msra.mxu0 0
        %1348 = vmatprep.subr.bf16.mxu0 0
        %1349 = vmatpush1.bf16.xpose.msra.mxu0 0
        %1350 = vmatprep.mubr.bf16.mxu0 0
        %1351 = vmatmul.mubr.bf16.gmra.mrb[0].mxu0 %v1313
        %v1352 = vpop.f32.mrb[0].mxu0
        %v1353 = vadd.f32 %v1258, %v1352
        %v1354 = vpop.f32.mrb[0].mxu0
        %v1355 = vpop.f32.mrb[0].mxu0
        %v1356 = vadd.f32 %v1259, %v1355
        %v1357 = vpop.f32.mrb[0].mxu0
        %1358 = vdwg.mxu0
        %v1360 = vsel %vm1264, %v1240, 0
        %v1363 = vsel %vm1264, %v1246, 0
        %1365 = vmatprep.subr.bf16.mxu0 0
        %1366 = vmatpush1.bf16.xpose.msra.mxu0 %v1363
        %1367 = vmatprep.subr.bf16.mxu0 0
        %1368 = vmatpush1.bf16.xpose.msra.mxu0 0
        %1369 = vmatprep.subr.bf16.mxu0 0
        %1370 = vmatpush1.bf16.xpose.msra.mxu0 0
        %1371 = vmatprep.subr.bf16.mxu0 0
        %1372 = vmatpush1.bf16.xpose.msra.mxu0 0
        %1373 = vmatprep.subr.bf16.mxu0 0
        %1374 = vmatpush1.bf16.xpose.msra.mxu0 0
        %1375 = vmatprep.subr.bf16.mxu0 0
        %1376 = vmatpush1.bf16.xpose.msra.mxu0 0
        %1377 = vmatprep.subr.bf16.mxu0 0
        %1378 = vmatpush1.bf16.xpose.msra.mxu0 0
        %1379 = vmatprep.subr.bf16.mxu0 0
        %1380 = vmatpush1.bf16.xpose.msra.mxu0 0
        %1381 = vmatprep.subr.bf16.mxu0 0
        %1382 = vmatpush1.bf16.xpose.msra.mxu0 0
        %1383 = vmatprep.subr.bf16.mxu0 0
        %1384 = vmatpush1.bf16.xpose.msra.mxu0 0
        %1385 = vmatprep.subr.bf16.mxu0 0
        %1386 = vmatpush1.bf16.xpose.msra.mxu0 0
        %1387 = vmatprep.subr.bf16.mxu0 0
        %1388 = vmatpush1.bf16.xpose.msra.mxu0 0
        %1389 = vmatprep.subr.bf16.mxu0 0
        %1390 = vmatpush1.bf16.xpose.msra.mxu0 0
        %1391 = vmatprep.subr.bf16.mxu0 0
        %1392 = vmatpush1.bf16.xpose.msra.mxu0 0
        %1393 = vmatprep.subr.bf16.mxu0 0
        %1394 = vmatpush1.bf16.xpose.msra.mxu0 0
        %1395 = vmatprep.subr.bf16.mxu0 0
        %1396 = vmatpush1.bf16.xpose.msra.mxu0 0
        %1397 = vmatprep.mubr.bf16.mxu0 0
        %1398 = vmatmul.mubr.bf16.gmra.mrb[0].mxu0 %v1360
        %v1399 = vpop.f32.mrb[0].mxu0
        %v1400 = vadd.f32 %v1260, %v1399
        %v1401 = vpop.f32.mrb[0].mxu0
        %v1402 = vpop.f32.mrb[0].mxu0
        %v1403 = vadd.f32 %v1261, %v1402
        %v1404 = vpop.f32.mrb[0].mxu0
        %1405 = vdwg.mxu0
        %v1407 = vsel %vm1264, %v1243, 0
        %v1410 = vsel %vm1264, %v1247, 0
        %1412 = vmatprep.subr.bf16.mxu0 0
        %1413 = vmatpush1.bf16.xpose.msra.mxu0 %v1410
        %1414 = vmatprep.subr.bf16.mxu0 0
        %1415 = vmatpush1.bf16.xpose.msra.mxu0 0
        %1416 = vmatprep.subr.bf16.mxu0 0
        %1417 = vmatpush1.bf16.xpose.msra.mxu0 0
        %1418 = vmatprep.subr.bf16.mxu0 0
        %1419 = vmatpush1.bf16.xpose.msra.mxu0 0
        %1420 = vmatprep.subr.bf16.mxu0 0
        %1421 = vmatpush1.bf16.xpose.msra.mxu0 0
        %1422 = vmatprep.subr.bf16.mxu0 0
        %1423 = vmatpush1.bf16.xpose.msra.mxu0 0
        %1424 = vmatprep.subr.bf16.mxu0 0
        %1425 = vmatpush1.bf16.xpose.msra.mxu0 0
        %1426 = vmatprep.subr.bf16.mxu0 0
        %1427 = vmatpush1.bf16.xpose.msra.mxu0 0
        %1428 = vmatprep.subr.bf16.mxu0 0
        %1429 = vmatpush1.bf16.xpose.msra.mxu0 0
        %1430 = vmatprep.subr.bf16.mxu0 0
        %1431 = vmatpush1.bf16.xpose.msra.mxu0 0
        %1432 = vmatprep.subr.bf16.mxu0 0
        %1433 = vmatpush1.bf16.xpose.msra.mxu0 0
        %1434 = vmatprep.subr.bf16.mxu0 0
        %1435 = vmatpush1.bf16.xpose.msra.mxu0 0
        %1436 = vmatprep.subr.bf16.mxu0 0
        %1437 = vmatpush1.bf16.xpose.msra.mxu0 0
        %1438 = vmatprep.subr.bf16.mxu0 0
        %1439 = vmatpush1.bf16.xpose.msra.mxu0 0
        %1440 = vmatprep.subr.bf16.mxu0 0
        %1441 = vmatpush1.bf16.xpose.msra.mxu0 0
        %1442 = vmatprep.subr.bf16.mxu0 0
        %1443 = vmatpush1.bf16.xpose.msra.mxu0 0
        %1444 = vmatprep.mubr.bf16.mxu0 0
        %1445 = vmatmul.mubr.bf16.gmra.mrb[0].mxu0 %v1407
        %v1446 = vpop.f32.mrb[0].mxu0
        %v1447 = vadd.f32 %v1262, %v1446
        %v1448 = vpop.f32.mrb[0].mxu0
        %v1449 = vpop.f32.mrb[0].mxu0
        %v1450 = vadd.f32 %v1263, %v1449
        %v1451 = vpop.f32.mrb[0].mxu0
        %1452 = vdwg.mxu0
        %v1453 = vsel %vm1264, %v1306, -inf
        %1454 = vmax.xlane.f32.xlu0 %v1453
        %v1455 = vpop.xlane.xlu0 %1454
        %v1456 = vsel %vm1264, %v1309, -inf
        %1457 = vmax.xlane.f32.xlu0 %v1456
        %v1458 = vpop.xlane.xlu0 %1457
        %v1459 = vsel %vm1264, %v1353, -inf
        %1460 = vmax.xlane.f32.xlu0 %v1459
        %v1461 = vpop.xlane.xlu0 %1460
        %v1462 = vsel %vm1264, %v1356, -inf
        %1463 = vmax.xlane.f32.xlu0 %v1462
        %v1464 = vpop.xlane.xlu0 %1463
        %v1465 = vsel %vm1264, %v1400, -inf
        %1466 = vmax.xlane.f32.xlu0 %v1465
        %v1467 = vpop.xlane.xlu0 %1466
        %v1468 = vsel %vm1264, %v1403, -inf
        %1469 = vmax.xlane.f32.xlu0 %v1468
        %v1470 = vpop.xlane.xlu0 %1469
        %v1471 = vsel %vm1264, %v1447, -inf
        %1472 = vmax.xlane.f32.xlu0 %v1471
        %v1473 = vpop.xlane.xlu0 %1472
        %v1474 = vsel %vm1264, %v1450, -inf
        %1475 = vmax.xlane.f32.xlu0 %v1474
        %v1476 = vpop.xlane.xlu0 %1475
        %v1477 = vsub.f32 %v1306, %v1455
        %v1478 = vsub.f32 %v1309, %v1458
        %v1479 = vsub.f32 %v1353, %v1461
        %v1480 = vsub.f32 %v1356, %v1464
        %v1481 = vsub.f32 %v1400, %v1467
        %v1482 = vsub.f32 %v1403, %v1470
        %v1483 = vsub.f32 %v1447, %v1473
        %v1484 = vsub.f32 %v1450, %v1476
        %v1485 = vmul.f32 %v1477, 1.442695
        %v1486 = vpow.pop %v1485
        %v1487 = vmul.f32 %v1478, 1.442695
        %v1488 = vpow.pop %v1487
        %v1489 = vmul.f32 %v1479, 1.442695
        %v1490 = vpow.pop %v1489
        %v1491 = vmul.f32 %v1480, 1.442695
        %v1492 = vpow.pop %v1491
        %v1493 = vmul.f32 %v1481, 1.442695
        %v1494 = vpow.pop %v1493
        %v1495 = vmul.f32 %v1482, 1.442695
        %v1496 = vpow.pop %v1495
        %v1497 = vmul.f32 %v1483, 1.442695
        %v1498 = vpow.pop %v1497
        %v1499 = vmul.f32 %v1484, 1.442695
        %v1500 = vpow.pop %v1499
        %v1501 = vsel %vm1264, %v1486, 0.0
        %1502 = vadd.xlane.f32.xlu0 %v1501
        %v1503 = vpop.xlane.xlu0 %1502
        %v1504 = vsel %vm1264, %v1488, 0.0
        %1505 = vadd.xlane.f32.xlu0 %v1504
        %v1506 = vpop.xlane.xlu0 %1505
        %v1507 = vsel %vm1264, %v1490, 0.0
        %1508 = vadd.xlane.f32.xlu0 %v1507
        %v1509 = vpop.xlane.xlu0 %1508
        %v1510 = vsel %vm1264, %v1492, 0.0
        %1511 = vadd.xlane.f32.xlu0 %v1510
        %v1512 = vpop.xlane.xlu0 %1511
        %v1513 = vsel %vm1264, %v1494, 0.0
        %1514 = vadd.xlane.f32.xlu0 %v1513
        %v1515 = vpop.xlane.xlu0 %1514
        %v1516 = vsel %vm1264, %v1496, 0.0
        %1517 = vadd.xlane.f32.xlu0 %v1516
        %v1518 = vpop.xlane.xlu0 %1517
        %v1519 = vsel %vm1264, %v1498, 0.0
        %1520 = vadd.xlane.f32.xlu0 %v1519
        %v1521 = vpop.xlane.xlu0 %1520
        %v1522 = vsel %vm1264, %v1500, 0.0
        %1523 = vadd.xlane.f32.xlu0 %v1522
        %v1524 = vpop.xlane.xlu0 %1523
        %v1525 = vrcp.pop %v1503
        %v1526 = vmul.f32 %v1486, %v1525
        %v1527 = vrcp.pop %v1506
        %v1528 = vmul.f32 %v1488, %v1527
        %v1529 = vrcp.pop %v1509
        %v1530 = vmul.f32 %v1490, %v1529
        %v1531 = vrcp.pop %v1512
        %v1532 = vmul.f32 %v1492, %v1531
        %v1533 = vrcp.pop %v1515
        %v1534 = vmul.f32 %v1494, %v1533
        %v1535 = vrcp.pop %v1518
        %v1536 = vmul.f32 %v1496, %v1535
        %v1537 = vrcp.pop %v1521
        %v1538 = vmul.f32 %v1498, %v1537
        %v1539 = vrcp.pop %v1524
        %v1540 = vmul.f32 %v1500, %v1539
        %v1541 = vpack.c.bf16 %v1528, %v1526
        %v1542 = vpack.c.bf16 %v1532, %v1530
        %v1543 = vpack.c.bf16 %v1536, %v1534
        %v1544 = vpack.c.bf16 %v1540, %v1538
        %v1545 = vld [vmem:[#allocation3] sm:$0xf]
        %v1546 = vld [vmem:[#allocation3 + $0x4] sm:$0xf]
        %v1547 = vld [vmem:[#allocation3 + $0x8] sm:$0xf]
        %v1548 = vld [vmem:[#allocation3 + $0xc] sm:$0xf]
        %v1550 = vsel %vm1264, %v1541, 0
        %vm1552 = vcmask 1043456
        %v1554 = vsel %vm1552, %v1545, 0
        %1556 = vmatprep.subr.bf16.mxu0 0
        %1557 = vmatpush1.bf16.msra.mxu0 %v1554
        %1558 = vmatprep.subr.bf16.mxu0 0
        %1559 = vmatpush1.bf16.msra.mxu0 0
        %1560 = vmatprep.subr.bf16.mxu0 0
        %1561 = vmatpush1.bf16.msra.mxu0 0
        %1562 = vmatprep.subr.bf16.mxu0 0
        %1563 = vmatpush1.bf16.msra.mxu0 0
        %1564 = vmatprep.subr.bf16.mxu0 0
        %1565 = vmatpush1.bf16.msra.mxu0 0
        %1566 = vmatprep.subr.bf16.mxu0 0
        %1567 = vmatpush1.bf16.msra.mxu0 0
        %1568 = vmatprep.subr.bf16.mxu0 0
        %1569 = vmatpush1.bf16.msra.mxu0 0
        %1570 = vmatprep.subr.bf16.mxu0 0
        %1571 = vmatpush1.bf16.msra.mxu0 0
        %1572 = vmatprep.subr.bf16.mxu0 0
        %1573 = vmatpush1.bf16.msra.mxu0 0
        %1574 = vmatprep.subr.bf16.mxu0 0
        %1575 = vmatpush1.bf16.msra.mxu0 0
        %1576 = vmatprep.subr.bf16.mxu0 0
        %1577 = vmatpush1.bf16.msra.mxu0 0
        %1578 = vmatprep.subr.bf16.mxu0 0
        %1579 = vmatpush1.bf16.msra.mxu0 0
        %1580 = vmatprep.subr.bf16.mxu0 0
        %1581 = vmatpush1.bf16.msra.mxu0 0
        %1582 = vmatprep.subr.bf16.mxu0 0
        %1583 = vmatpush1.bf16.msra.mxu0 0
        %1584 = vmatprep.subr.bf16.mxu0 0
        %1585 = vmatpush1.bf16.msra.mxu0 0
        %1586 = vmatprep.subr.bf16.mxu0 0
        %1587 = vmatpush1.bf16.msra.mxu0 0
        %1588 = vmatprep.mubr.bf16.mxu0 0
        %1589 = vmatmul.mubr.bf16.gmra.mrb[0].mxu0 %v1550
        %v1590 = vpop.f32.mrb[0].mxu0
        %v1591 = vadd.f32 0.0, %v1590
        %v1592 = vpop.f32.mrb[0].mxu0
        %v1593 = vpop.f32.mrb[0].mxu0
        %v1594 = vadd.f32 0.0, %v1593
        %v1595 = vpop.f32.mrb[0].mxu0
        %1596 = vdwg.mxu0
        %v1598 = vsel %vm1264, %v1542, 0
        %v1601 = vsel %vm1552, %v1546, 0
        %1603 = vmatprep.subr.bf16.mxu0 0
        %1604 = vmatpush1.bf16.msra.mxu0 %v1601
        %1605 = vmatprep.subr.bf16.mxu0 0
        %1606 = vmatpush1.bf16.msra.mxu0 0
        %1607 = vmatprep.subr.bf16.mxu0 0
        %1608 = vmatpush1.bf16.msra.mxu0 0
        %1609 = vmatprep.subr.bf16.mxu0 0
        %1610 = vmatpush1.bf16.msra.mxu0 0
        %1611 = vmatprep.subr.bf16.mxu0 0
        %1612 = vmatpush1.bf16.msra.mxu0 0
        %1613 = vmatprep.subr.bf16.mxu0 0
        %1614 = vmatpush1.bf16.msra.mxu0 0
        %1615 = vmatprep.subr.bf16.mxu0 0
        %1616 = vmatpush1.bf16.msra.mxu0 0
        %1617 = vmatprep.subr.bf16.mxu0 0
        %1618 = vmatpush1.bf16.msra.mxu0 0
        %1619 = vmatprep.subr.bf16.mxu0 0
        %1620 = vmatpush1.bf16.msra.mxu0 0
        %1621 = vmatprep.subr.bf16.mxu0 0
        %1622 = vmatpush1.bf16.msra.mxu0 0
        %1623 = vmatprep.subr.bf16.mxu0 0
        %1624 = vmatpush1.bf16.msra.mxu0 0
        %1625 = vmatprep.subr.bf16.mxu0 0
        %1626 = vmatpush1.bf16.msra.mxu0 0
        %1627 = vmatprep.subr.bf16.mxu0 0
        %1628 = vmatpush1.bf16.msra.mxu0 0
        %1629 = vmatprep.subr.bf16.mxu0 0
        %1630 = vmatpush1.bf16.msra.mxu0 0
        %1631 = vmatprep.subr.bf16.mxu0 0
        %1632 = vmatpush1.bf16.msra.mxu0 0
        %1633 = vmatprep.subr.bf16.mxu0 0
        %1634 = vmatpush1.bf16.msra.mxu0 0
        %1635 = vmatprep.mubr.bf16.mxu0 0
        %1636 = vmatmul.mubr.bf16.gmra.mrb[0].mxu0 %v1598
        %v1637 = vpop.f32.mrb[0].mxu0
        %v1638 = vadd.f32 0.0, %v1637
        %v1639 = vpop.f32.mrb[0].mxu0
        %v1640 = vpop.f32.mrb[0].mxu0
        %v1641 = vadd.f32 0.0, %v1640
        %v1642 = vpop.f32.mrb[0].mxu0
        %1643 = vdwg.mxu0
        %v1645 = vsel %vm1264, %v1543, 0
        %v1648 = vsel %vm1552, %v1547, 0
        %1650 = vmatprep.subr.bf16.mxu0 0
        %1651 = vmatpush1.bf16.msra.mxu0 %v1648
        %1652 = vmatprep.subr.bf16.mxu0 0
        %1653 = vmatpush1.bf16.msra.mxu0 0
        %1654 = vmatprep.subr.bf16.mxu0 0
        %1655 = vmatpush1.bf16.msra.mxu0 0
        %1656 = vmatprep.subr.bf16.mxu0 0
        %1657 = vmatpush1.bf16.msra.mxu0 0
        %1658 = vmatprep.subr.bf16.mxu0 0
        %1659 = vmatpush1.bf16.msra.mxu0 0
        %1660 = vmatprep.subr.bf16.mxu0 0
        %1661 = vmatpush1.bf16.msra.mxu0 0
        %1662 = vmatprep.subr.bf16.mxu0 0
        %1663 = vmatpush1.bf16.msra.mxu0 0
        %1664 = vmatprep.subr.bf16.mxu0 0
        %1665 = vmatpush1.bf16.msra.mxu0 0
        %1666 = vmatprep.subr.bf16.mxu0 0
        %1667 = vmatpush1.bf16.msra.mxu0 0
        %1668 = vmatprep.subr.bf16.mxu0 0
        %1669 = vmatpush1.bf16.msra.mxu0 0
        %1670 = vmatprep.subr.bf16.mxu0 0
        %1671 = vmatpush1.bf16.msra.mxu0 0
        %1672 = vmatprep.subr.bf16.mxu0 0
        %1673 = vmatpush1.bf16.msra.mxu0 0
        %1674 = vmatprep.subr.bf16.mxu0 0
        %1675 = vmatpush1.bf16.msra.mxu0 0
        %1676 = vmatprep.subr.bf16.mxu0 0
        %1677 = vmatpush1.bf16.msra.mxu0 0
        %1678 = vmatprep.subr.bf16.mxu0 0
        %1679 = vmatpush1.bf16.msra.mxu0 0
        %1680 = vmatprep.subr.bf16.mxu0 0
        %1681 = vmatpush1.bf16.msra.mxu0 0
        %1682 = vmatprep.mubr.bf16.mxu0 0
        %1683 = vmatmul.mubr.bf16.gmra.mrb[0].mxu0 %v1645
        %v1684 = vpop.f32.mrb[0].mxu0
        %v1685 = vadd.f32 0.0, %v1684
        %v1686 = vpop.f32.mrb[0].mxu0
        %v1687 = vpop.f32.mrb[0].mxu0
        %v1688 = vadd.f32 0.0, %v1687
        %v1689 = vpop.f32.mrb[0].mxu0
        %1690 = vdwg.mxu0
        %v1692 = vsel %vm1264, %v1544, 0
        %v1695 = vsel %vm1552, %v1548, 0
        %1697 = vmatprep.subr.bf16.mxu0 0
        %1698 = vmatpush1.bf16.msra.mxu0 %v1695
        %1699 = vmatprep.subr.bf16.mxu0 0
        %1700 = vmatpush1.bf16.msra.mxu0 0
        %1701 = vmatprep.subr.bf16.mxu0 0
        %1702 = vmatpush1.bf16.msra.mxu0 0
        %1703 = vmatprep.subr.bf16.mxu0 0
        %1704 = vmatpush1.bf16.msra.mxu0 0
        %1705 = vmatprep.subr.bf16.mxu0 0
        %1706 = vmatpush1.bf16.msra.mxu0 0
        %1707 = vmatprep.subr.bf16.mxu0 0
        %1708 = vmatpush1.bf16.msra.mxu0 0
        %1709 = vmatprep.subr.bf16.mxu0 0
        %1710 = vmatpush1.bf16.msra.mxu0 0
        %1711 = vmatprep.subr.bf16.mxu0 0
        %1712 = vmatpush1.bf16.msra.mxu0 0
        %1713 = vmatprep.subr.bf16.mxu0 0
        %1714 = vmatpush1.bf16.msra.mxu0 0
        %1715 = vmatprep.subr.bf16.mxu0 0
        %1716 = vmatpush1.bf16.msra.mxu0 0
        %1717 = vmatprep.subr.bf16.mxu0 0
        %1718 = vmatpush1.bf16.msra.mxu0 0
        %1719 = vmatprep.subr.bf16.mxu0 0
        %1720 = vmatpush1.bf16.msra.mxu0 0
        %1721 = vmatprep.subr.bf16.mxu0 0
        %1722 = vmatpush1.bf16.msra.mxu0 0
        %1723 = vmatprep.subr.bf16.mxu0 0
        %1724 = vmatpush1.bf16.msra.mxu0 0
        %1725 = vmatprep.subr.bf16.mxu0 0
        %1726 = vmatpush1.bf16.msra.mxu0 0
        %1727 = vmatprep.subr.bf16.mxu0 0
        %1728 = vmatpush1.bf16.msra.mxu0 0
        %1729 = vmatprep.mubr.bf16.mxu0 0
        %1730 = vmatmul.mubr.bf16.gmra.mrb[0].mxu0 %v1692
        %v1731 = vpop.f32.mrb[0].mxu0
        %v1732 = vadd.f32 0.0, %v1731
        %v1733 = vpop.f32.mrb[0].mxu0
        %v1734 = vpop.f32.mrb[0].mxu0
        %v1735 = vadd.f32 0.0, %v1734
        %v1736 = vpop.f32.mrb[0].mxu0
        %1737 = vdwg.mxu0
        %v1738 = vpack.c.bf16 %v1594, %v1591
        %v1739 = vpack.c.bf16 %v1641, %v1638
        %v1740 = vpack.c.bf16 %v1688, %v1685
        %v1741 = vpack.c.bf16 %v1735, %v1732
        %v1744 = vpack.i.b16 %v1739, %v1738
        %v1746 = vshrl.u32 %v1738, 16
        %v1747 = vshrl.u32 %v1739, 16
        %v1748 = vpack.i.b16 %v1747, %v1746
        %v1752 = vpack.i.b16 %v1741, %v1740
        %v1754 = vshrl.u32 %v1740, 16
        %v1755 = vshrl.u32 %v1741, 16
        %v1756 = vpack.i.b16 %v1755, %v1754
        %v1758 = vcombine.high %v1744, %v995
        %v1760 = vunpack.c.l.s4 1983009808
        %v1761 = vunpack.c.0.s8 %v1760
        %v1762 = vlaneseq
        %v1763 = vshrl.u32 %v1762, 7
        %v1764 = vsub.s32 %v1761, %v1763
        %v1765 = vrot.slane %v1744, %v1764
        %v1767 = vunpack.c.l.s4 1983009808
        %v1768 = vunpack.c.0.s8 %v1767
        %v1769 = vlaneseq
        %v1770 = vshrl.u32 %v1769, 7
        %v1771 = vsub.s32 %v1768, %v1770
        %v1772 = vrot.slane %v1758, %v1771
        %v1773 = vcombine.high %v1752, %v995
        %v1775 = vunpack.c.l.s4 1983009808
        %v1776 = vunpack.c.0.s8 %v1775
        %v1777 = vlaneseq
        %v1778 = vshrl.u32 %v1777, 7
        %v1779 = vsub.s32 %v1776, %v1778
        %v1780 = vrot.slane %v1752, %v1779
        %v1782 = vunpack.c.l.s4 1983009808
        %v1783 = vunpack.c.0.s8 %v1782
        %v1784 = vlaneseq
        %v1785 = vshrl.u32 %v1784, 7
        %v1786 = vsub.s32 %v1783, %v1785
        %v1787 = vrot.slane %v1773, %v1786
        %v1788 = vcombine.low %v1765, %v1780
        %v1789 = vcombine.high %v1765, %v1780
        %v1791 = vunpack.c.l.s4 1934713408
        %v1792 = vunpack.c.0.s8 %v1791
        %v1793 = vlaneseq
        %v1794 = vshrl.u32 %v1793, 7
        %v1795 = vsub.s32 %v1792, %v1794
        %v1796 = vrot.slane %v1788, %v1795
        %v1798 = vunpack.c.l.s4 1934713408
        %v1799 = vunpack.c.0.s8 %v1798
        %v1800 = vlaneseq
        %v1801 = vshrl.u32 %v1800, 7
        %v1802 = vsub.s32 %v1799, %v1801
        %v1803 = vrot.slane %v1789, %v1802
        %v1804 = vcombine.low %v1772, %v1787
        %v1805 = vcombine.high %v1772, %v1787
        %v1807 = vunpack.c.l.s4 1934713408
        %v1808 = vunpack.c.0.s8 %v1807
        %v1809 = vlaneseq
        %v1810 = vshrl.u32 %v1809, 7
        %v1811 = vsub.s32 %v1808, %v1810
        %v1812 = vrot.slane %v1804, %v1811
        %v1814 = vunpack.c.l.s4 1934713408
        %v1815 = vunpack.c.0.s8 %v1814
        %v1816 = vlaneseq
        %v1817 = vshrl.u32 %v1816, 7
        %v1818 = vsub.s32 %v1815, %v1817
        %v1819 = vrot.slane %v1805, %v1818
        %v1820 = vcombine.high %v1796, 0
        %v1821 = vcombine.high %v1803, 0
        %v1822 = vcombine.high %v1812, 0
        %v1823 = vcombine.high %v1819, 0
        %v1824 = vcombine.high %v1748, %v998
        %v1826 = vunpack.c.l.s4 1983009808
        %v1827 = vunpack.c.0.s8 %v1826
        %v1828 = vlaneseq
        %v1829 = vshrl.u32 %v1828, 7
        %v1830 = vsub.s32 %v1827, %v1829
        %v1831 = vrot.slane %v1748, %v1830
        %v1833 = vunpack.c.l.s4 1983009808
        %v1834 = vunpack.c.0.s8 %v1833
        %v1835 = vlaneseq
        %v1836 = vshrl.u32 %v1835, 7
        %v1837 = vsub.s32 %v1834, %v1836
        %v1838 = vrot.slane %v1824, %v1837
        %v1839 = vcombine.high %v1756, %v998
        %v1841 = vunpack.c.l.s4 1983009808
        %v1842 = vunpack.c.0.s8 %v1841
        %v1843 = vlaneseq
        %v1844 = vshrl.u32 %v1843, 7
        %v1845 = vsub.s32 %v1842, %v1844
        %v1846 = vrot.slane %v1756, %v1845
        %v1848 = vunpack.c.l.s4 1983009808
        %v1849 = vunpack.c.0.s8 %v1848
        %v1850 = vlaneseq
        %v1851 = vshrl.u32 %v1850, 7
        %v1852 = vsub.s32 %v1849, %v1851
        %v1853 = vrot.slane %v1839, %v1852
        %v1854 = vcombine.low %v1831, %v1846
        %v1855 = vcombine.high %v1831, %v1846
        %v1857 = vunpack.c.l.s4 1934713408
        %v1858 = vunpack.c.0.s8 %v1857
        %v1859 = vlaneseq
        %v1860 = vshrl.u32 %v1859, 7
        %v1861 = vsub.s32 %v1858, %v1860
        %v1862 = vrot.slane %v1854, %v1861
        %v1864 = vunpack.c.l.s4 1934713408
        %v1865 = vunpack.c.0.s8 %v1864
        %v1866 = vlaneseq
        %v1867 = vshrl.u32 %v1866, 7
        %v1868 = vsub.s32 %v1865, %v1867
        %v1869 = vrot.slane %v1855, %v1868
        %v1870 = vcombine.low %v1838, %v1853
        %v1871 = vcombine.high %v1838, %v1853
        %v1873 = vunpack.c.l.s4 1934713408
        %v1874 = vunpack.c.0.s8 %v1873
        %v1875 = vlaneseq
        %v1876 = vshrl.u32 %v1875, 7
        %v1877 = vsub.s32 %v1874, %v1876
        %v1878 = vrot.slane %v1870, %v1877
        %v1880 = vunpack.c.l.s4 1934713408
        %v1881 = vunpack.c.0.s8 %v1880
        %v1882 = vlaneseq
        %v1883 = vshrl.u32 %v1882, 7
        %v1884 = vsub.s32 %v1881, %v1883
        %v1885 = vrot.slane %v1871, %v1884
        %v1886 = vcombine.high %v1862, 0
        %v1887 = vcombine.high %v1869, 0
        %v1888 = vcombine.high %v1878, 0
        %v1889 = vcombine.high %v1885, 0
        %v1890 = vcombine.low %v1796, %v1803
        %v1892 = vunpack.c.l.s4 1983009808
        %v1893 = vunpack.c.0.s8 %v1892
        %v1894 = vlaneseq
        %v1895 = vshrl.u32 %v1894, 7
        %v1896 = vsub.s32 %v1893, %v1895
        %v1897 = vrot.slane %v1890, %v1896
        %v1898 = vcombine.low %v1820, %v1821
        %v1900 = vunpack.c.l.s4 1983009808
        %v1901 = vunpack.c.0.s8 %v1900
        %v1902 = vlaneseq
        %v1903 = vshrl.u32 %v1902, 7
        %v1904 = vsub.s32 %v1901, %v1903
        %v1905 = vrot.slane %v1898, %v1904
        %v1906 = vcombine.low %v1812, %v1819
        %v1908 = vunpack.c.l.s4 1983009808
        %v1909 = vunpack.c.0.s8 %v1908
        %v1910 = vlaneseq
        %v1911 = vshrl.u32 %v1910, 7
        %v1912 = vsub.s32 %v1909, %v1911
        %v1913 = vrot.slane %v1906, %v1912
        %v1914 = vcombine.low %v1822, %v1823
        %v1916 = vunpack.c.l.s4 1983009808
        %v1917 = vunpack.c.0.s8 %v1916
        %v1918 = vlaneseq
        %v1919 = vshrl.u32 %v1918, 7
        %v1920 = vsub.s32 %v1917, %v1919
        %v1921 = vrot.slane %v1914, %v1920
        %v1922 = vcombine.low %v1897, %v1905
        %v1924 = vunpack.c.l.s4 1934713408
        %v1925 = vunpack.c.0.s8 %v1924
        %v1926 = vlaneseq
        %v1927 = vshrl.u32 %v1926, 7
        %v1928 = vsub.s32 %v1925, %v1927
        %v1929 = vrot.slane %v1922, %v1928
        %v1930 = vcombine.low %v1913, %v1921
        %v1932 = vunpack.c.l.s4 1934713408
        %v1933 = vunpack.c.0.s8 %v1932
        %v1934 = vlaneseq
        %v1935 = vshrl.u32 %v1934, 7
        %v1936 = vsub.s32 %v1933, %v1935
        %v1937 = vrot.slane %v1930, %v1936
        %v1938 = vcombine.low %v1929, %v1937
        %v1939 = vcombine.high %v1929, %v1937
        %v1940 = vcombine.low %v1862, %v1869
        %v1942 = vunpack.c.l.s4 1983009808
        %v1943 = vunpack.c.0.s8 %v1942
        %v1944 = vlaneseq
        %v1945 = vshrl.u32 %v1944, 7
        %v1946 = vsub.s32 %v1943, %v1945
        %v1947 = vrot.slane %v1940, %v1946
        %v1948 = vcombine.low %v1886, %v1887
        %v1950 = vunpack.c.l.s4 1983009808
        %v1951 = vunpack.c.0.s8 %v1950
        %v1952 = vlaneseq
        %v1953 = vshrl.u32 %v1952, 7
        %v1954 = vsub.s32 %v1951, %v1953
        %v1955 = vrot.slane %v1948, %v1954
        %v1956 = vcombine.low %v1878, %v1885
        %v1958 = vunpack.c.l.s4 1983009808
        %v1959 = vunpack.c.0.s8 %v1958
        %v1960 = vlaneseq
        %v1961 = vshrl.u32 %v1960, 7
        %v1962 = vsub.s32 %v1959, %v1961
        %v1963 = vrot.slane %v1956, %v1962
        %v1964 = vcombine.low %v1888, %v1889
        %v1966 = vunpack.c.l.s4 1983009808
        %v1967 = vunpack.c.0.s8 %v1966
        %v1968 = vlaneseq
        %v1969 = vshrl.u32 %v1968, 7
        %v1970 = vsub.s32 %v1967, %v1969
        %v1971 = vrot.slane %v1964, %v1970
        %v1972 = vcombine.low %v1947, %v1955
        %v1974 = vunpack.c.l.s4 1934713408
        %v1975 = vunpack.c.0.s8 %v1974
        %v1976 = vlaneseq
        %v1977 = vshrl.u32 %v1976, 7
        %v1978 = vsub.s32 %v1975, %v1977
        %v1979 = vrot.slane %v1972, %v1978
        %v1980 = vcombine.low %v1963, %v1971
        %v1982 = vunpack.c.l.s4 1934713408
        %v1983 = vunpack.c.0.s8 %v1982
        %v1984 = vlaneseq
        %v1985 = vshrl.u32 %v1984, 7
        %v1986 = vsub.s32 %v1983, %v1985
        %v1987 = vrot.slane %v1980, %v1986
        %v1988 = vcombine.low %v1979, %v1987
        %v1989 = vcombine.high %v1979, %v1987
        %v1992 = vpack.i.b16 %v1988, %v1938
        %v1993 = vshrl.u32 %v1938, 16
        %v1994 = vshrl.u32 %v1988, 16
        %v1995 = vpack.i.b16 %v1994, %v1993
        %v1998 = vpack.i.b16 %v1989, %v1939
        %v1999 = vshrl.u32 %v1939, 16
        %v2000 = vshrl.u32 %v1989, 16
        %v2001 = vpack.i.b16 %v2000, %v1999
        %2002 = vrot.lane.b32.xlu0 %v1995, 8
        %v2003 = vpop.permute.xlu0 %2002
        %2004 = vrot.lane.b32.xlu0 %v1998, 16
        %v2005 = vpop.permute.xlu0 %2004
        %2006 = vrot.lane.b32.xlu0 %v2001, 24
        %v2007 = vpop.permute.xlu0 %2006
        %v2010 = vsel %vm1264, %v1992, %v2003
        %vm2011 = vcmask 130048
        %v2013 = vsel %vm2011, %v2010, %v2005
        %vm2014 = vcmask 195584
        %v2016 = vsel %vm2014, %v2013, %v2007
        %v2017 = vld [vmem:[#allocation10] sm:$0xf]
        %v2018 = vld [vmem:[#allocation10 + $0x4] sm:$0xf]
        %v2019 = vld [vmem:[#allocation10 + $0x8] sm:$0xf]
        %v2020 = vld [vmem:[#allocation10 + $0xc] sm:$0xf]
        %v2021 = vld [vmem:[%s8] sm:$0x1]
        %v2023 = vlaneseq
        %v2024 = vshrl.u32 %v2023, 7
        %v2025 = vsub.s32 0, %v2024
        %v2026 = vrot.slane %v2021, %v2025
        %v2032 = vunpack.c.l.b16 %v2017
        %v2033 = vunpack.c.l.b16 %v2018
        %v2034 = vunpack.c.l.b16 %v2019
        %v2035 = vunpack.c.l.b16 %v2020
        %v2036 = vpack.c.b16 %v2033, %v2032
        %v2037 = vpack.c.b16 %v2035, %v2034
        %v2040 = vsel %vm925, %v2016, 0
        %2042 = vmatprep.subr.bf16.mxu0 0
        %2043 = vmatpush1.bf16.msra.mxu0 %v2036
        %2044 = vmatprep.subr.bf16.mxu0 0
        %2045 = vmatpush1.bf16.msra.mxu0 %v2037
        %2046 = vmatprep.subr.bf16.mxu0 0
        %2047 = vmatpush1.bf16.msra.mxu0 0
        %2048 = vmatprep.subr.bf16.mxu0 0
        %2049 = vmatpush1.bf16.msra.mxu0 0
        %2050 = vmatprep.subr.bf16.mxu0 0
        %2051 = vmatpush1.bf16.msra.mxu0 0
        %2052 = vmatprep.subr.bf16.mxu0 0
        %2053 = vmatpush1.bf16.msra.mxu0 0
        %2054 = vmatprep.subr.bf16.mxu0 0
        %2055 = vmatpush1.bf16.msra.mxu0 0
        %2056 = vmatprep.subr.bf16.mxu0 0
        %2057 = vmatpush1.bf16.msra.mxu0 0
        %2058 = vmatprep.subr.bf16.mxu0 0
        %2059 = vmatpush1.bf16.msra.mxu0 0
        %2060 = vmatprep.subr.bf16.mxu0 0
        %2061 = vmatpush1.bf16.msra.mxu0 0
        %2062 = vmatprep.subr.bf16.mxu0 0
        %2063 = vmatpush1.bf16.msra.mxu0 0
        %2064 = vmatprep.subr.bf16.mxu0 0
        %2065 = vmatpush1.bf16.msra.mxu0 0
        %2066 = vmatprep.subr.bf16.mxu0 0
        %2067 = vmatpush1.bf16.msra.mxu0 0
        %2068 = vmatprep.subr.bf16.mxu0 0
        %2069 = vmatpush1.bf16.msra.mxu0 0
        %2070 = vmatprep.subr.bf16.mxu0 0
        %2071 = vmatpush1.bf16.msra.mxu0 0
        %2072 = vmatprep.subr.bf16.mxu0 0
        %2073 = vmatpush1.bf16.msra.mxu0 0
        %2074 = vmatprep.mubr.bf16.mxu0 0
        %2075 = vmatmul.mubr.bf16.gmra.mrb[0].mxu0 %v2040
        %v2076 = vpop.f32.mrb[0].mxu0
        %v2077 = vadd.f32 %v2026, %v2076
        %v2078 = vpop.f32.mrb[0].mxu0
        %v2079 = vpop.f32.mrb[0].mxu0
        %v2080 = vadd.f32 %v2026, %v2079
        %v2081 = vpop.f32.mrb[0].mxu0
        %2082 = vdwg.mxu0
        %2083 = vst.msk [vmem:[%s444] sm:$0xff] %vm925, %v2077
        %2084 = vst.msk [vmem:[%s444 + $0x8] sm:$0xff] %vm925, %v2080
        %s2085 = sand.u32 %s259, 1
        %s2086 = scalar_lea.sflag [#allocation6], %s2085
        %s2087 = sand.u32 %s259, 1
        %s2088 = smul.addr %s2087, 16
        %s2089 = scalar_lea.vmem [#allocation12], %s2088
        // Predicated region
        $region77: #{tpu_custom_call.1} parent=55 // pred_check
          %p2090 = pneg %p269
        $region78: #{tpu_custom_call.1} parent=55 // pred_check_branch
          %2092 = sbr.rel (%p2090) target = $region80
        $region79: #{tpu_custom_call.1} parent=55 // pred_region
          %s2093 = smul.u32 2, %s31
          %s2095 = ssub.s32 256, 256
          %2096 = vsyncadd %s2086, %s2095
          %s2097 = smul.addr %s30, 2
          %s2098 = sadd.s32 %s2093, %s2097
          %s2099 = smul.addr %s2098, 128
          %s2100 = scalar_lea.hbm %s9, %s2099
          %s2101 = sshll.u32 %s2089, 4
          %s2102 = int_to_ptr.vmem [resolvable:$true] %s2101
          %2107 = dma.vmem_to_hbm [thread:$0]  %s2102, 256, %s2100, %s2086, 128, 128, 8
        $region80: #{tpu_custom_call.1} parent=55 // pred_fallthru
          _
      $region56: #{tpu_custom_call.1} parent=5 // pred_fallthru
        _
      %p2108 = scmp.le.s32.totalorder 2, %s21
      // Predicated region
      $region81: #{tpu_custom_call.1} parent=5 // pred_check
        %p2109 = pneg %p2108
      $region82: #{tpu_custom_call.1} parent=5 // pred_check_branch
        %2111 = sbr.rel (%p2109) target = $region84
      $region83: #{tpu_custom_call.1} parent=5 // pred_region
        %s2112 = ssub.s32 %s21, 2
        // Predicated region
        $region85: #{tpu_custom_call.1} parent=83 // pred_check
          %p2113 = pneg %p275
        $region86: #{tpu_custom_call.1} parent=83 // pred_check_branch
          %2115 = sbr.rel (%p2113) target = $region88
        $region87: #{tpu_custom_call.1} parent=83 // pred_region
          %s2116 = sand.u32 %s260, 1
          %s2117 = scalar_lea.sflag [#allocation6], %s2116
          %s2118 = sand.u32 %s260, 1
          %s2119 = smul.addr %s2118, 16
          %s2120 = scalar_lea.vmem [#allocation12], %s2119
          %2121 = dma.done %s2117, 256
        $region88: #{tpu_custom_call.1} parent=83 // pred_fallthru
          _
      $region84: #{tpu_custom_call.1} parent=5 // pred_fallthru
        _
    $region6: #{tpu_custom_call.1} parent=1 // loop_footer
      %s25 = sadd.s32 1, %s21
    $region7: #{tpu_custom_call.1} parent=1 // loop_footer_branch
      %20 = sbr.rel target = $region3
    $region8: #{tpu_custom_call.1} parent=1 // loop_exit
      _
    %2122 = vsyncpa [#allocation5], 1
    %s2123 = scalar_lea.sflag [#allocation5], 1
    %2124 = vsyncpa %s2123, 1
    %2125 = vsyncpa [#allocation8], 1
    %2126 = vsyncpa [#allocation11], 1
    %2127 = vsyncpa [#allocation6], 1
    %s2128 = scalar_lea.sflag [#allocation6], 1
    %2129 = vsyncpa %s2128, 1

</llo_original>
